<compile_context>
chip_gen: v5e
topology: v5e:2x2
jax: 0.10.0
libtpu: 0.0.40
codegen_flags: <defaults>
</compile_context>

<pallas_src>
import functools

import jax
import jax.numpy as jnp
from jax.experimental import pallas as pl
from jax.experimental.pallas import tpu as pltpu


def _pick_tile(n, candidates):
    for c in candidates:
        if n % c == 0:
            return c
    return n


# ------------------------------ linear kernels ------------------------------

def _linear_kernel(x_ref, w_ref, b_ref, o_ref):
    # x_ref: (1, tm, Cin); w_ref: (Cin, Cout) bf16 resident; b_ref: (1, Cout) f32.
    x = x_ref[0].astype(jnp.bfloat16)          # no-op when the input is already bf16
    y = jnp.dot(x, w_ref[...], preferred_element_type=jnp.float32) + b_ref[...]
    o_ref[0] = y.astype(o_ref.dtype)


def _pallas_linear(x, w_t, b, *, out_dtype=None, tm=None):
    """x: (B, N, Cin); w_t: (Cin, Cout) pre-transposed bf16; b: (Cout,) f32."""
    B, N, Cin = x.shape
    Cout = w_t.shape[1]
    out_dtype = x.dtype if out_dtype is None else out_dtype
    tm = _pick_tile(N, (512, 256, 128)) if tm is None else tm
    b2 = b.reshape(1, Cout)
    return pl.pallas_call(
        _linear_kernel,
        out_shape=jax.ShapeDtypeStruct((B, N, Cout), out_dtype),
        grid_spec=pltpu.PrefetchScalarGridSpec(
            num_scalar_prefetch=0,
            grid=(B, N // tm),
            in_specs=[
                pl.BlockSpec((1, tm, Cin), lambda b_, i: (b_, i, 0)),
                pl.BlockSpec((Cin, Cout), lambda b_, i: (0, 0)),   # resident weight
                pl.BlockSpec((1, Cout), lambda b_, i: (0, 0)),     # resident bias
            ],
            out_specs=pl.BlockSpec((1, tm, Cout), lambda b_, i: (b_, i, 0)),
        ),
        compiler_params=pltpu.CompilerParams(
            dimension_semantics=("parallel", "parallel"),
            vmem_limit_bytes=32 * 1024 * 1024,
        ),
    )(x, w_t, b2)


def _qkv_linear_kernel(x_ref, w_ref, b_ref, q_ref, k_ref, v_ref):
    # x_ref: (1, tm, Cin); w_ref: (Cin, 3C) bf16; outputs three (1, tm, C) bf16 slabs.
    x = x_ref[0].astype(jnp.bfloat16)
    y = jnp.dot(x, w_ref[...], preferred_element_type=jnp.float32) + b_ref[...]
    C = q_ref.shape[-1]
    q_ref[0] = y[:, :C].astype(q_ref.dtype)
    k_ref[0] = y[:, C:2 * C].astype(k_ref.dtype)
    v_ref[0] = y[:, 2 * C:].astype(v_ref.dtype)


def _pallas_qkv_proj(x, w_t, b, *, tm=None):
    """Fused qkv projection; emits separate contiguous bf16 q, k, v (B, N, C)."""
    B, N, Cin = x.shape
    C3 = w_t.shape[1]
    C = C3 // 3
    tm = _pick_tile(N, (512, 256, 128)) if tm is None else tm
    b2 = b.reshape(1, C3)
    out_sds = jax.ShapeDtypeStruct((B, N, C), jnp.bfloat16)
    out_spec = pl.BlockSpec((1, tm, C), lambda b_, i: (b_, i, 0))
    return pl.pallas_call(
        _qkv_linear_kernel,
        out_shape=(out_sds, out_sds, out_sds),
        grid_spec=pltpu.PrefetchScalarGridSpec(
            num_scalar_prefetch=0,
            grid=(B, N // tm),
            in_specs=[
                pl.BlockSpec((1, tm, Cin), lambda b_, i: (b_, i, 0)),
                pl.BlockSpec((Cin, C3), lambda b_, i: (0, 0)),
                pl.BlockSpec((1, C3), lambda b_, i: (0, 0)),
            ],
            out_specs=(out_spec, out_spec, out_spec),
        ),
        compiler_params=pltpu.CompilerParams(
            dimension_semantics=("parallel", "parallel"),
            vmem_limit_bytes=32 * 1024 * 1024,
        ),
    )(x, w_t, b2)


# --------------------------- flash attention kernel --------------------------

def _flash_attn_kernel(q_ref, k_ref, v_ref, o_ref, m_ref, l_ref, acc_ref,
                       *, num_heads, head_dim):
    # q_ref: (1, tq, C) bf16 (softmax scale pre-folded); k/v_ref: (1, tk, C) bf16.
    # scratch m/l/acc: (tq, C) f32 — head h's state lives broadcast across its
    # Dh-lane strip so every scratch access is a single full-width op.
    kv = pl.program_id(2)

    @pl.when(kv == 0)
    def _():
        m_ref[...] = jnp.full(m_ref.shape, -jnp.inf, m_ref.dtype)
        l_ref[...] = jnp.zeros(l_ref.shape, l_ref.dtype)
        acc_ref[...] = jnp.zeros(acc_ref.shape, acc_ref.dtype)

    q = q_ref[0]                      # (tq, C)
    k = k_ref[0]                      # (tk, C)
    v = v_ref[0]                      # (tk, C)

    m_all = m_ref[...]                # one full-width load each per kv step
    l_all = l_ref[...]
    acc_all = acc_ref[...]

    tq = q.shape[0]
    m_parts, l_parts, acc_parts = [], [], []
    for h in range(num_heads):
        lo = h * head_dim
        hi = lo + head_dim
        q_h, k_h, v_h = q[:, lo:hi], k[:, lo:hi], v[:, lo:hi]

        # Contract last dims of both operands: no k.T relayout per tile.
        s = jax.lax.dot_general(q_h, k_h, (((1,), (1,)), ((), ())),
                                preferred_element_type=jnp.float32)   # (tq, tk)

        m_prev = m_all[:, lo:lo + 1]                       # (tq, 1)
        l_prev = l_all[:, lo:lo + 1]                       # (tq, 1)
        row_max = jnp.max(s, axis=-1, keepdims=True)       # (tq, 1)
        m_new = jnp.maximum(m_prev, row_max)               # (tq, 1)
        alpha = jnp.exp(m_prev - m_new)                    # (tq, 1) — narrow EUP work
        p = jnp.exp(s - m_new)                             # (tq, tk)
        l_new = alpha * l_prev + jnp.sum(p, axis=-1, keepdims=True)   # (tq, 1)
        pv = jnp.dot(p.astype(jnp.bfloat16), v_h,
                     preferred_element_type=jnp.float32)              # (tq, Dh)
        acc_new = alpha * acc_all[:, lo:hi] + pv                      # (tq, Dh)

        m_parts.append(jnp.broadcast_to(m_new, (tq, head_dim)))
        l_parts.append(jnp.broadcast_to(l_new, (tq, head_dim)))
        acc_parts.append(acc_new)

    # Lane-concatenate per-head slabs -> one unmasked full-width store per scratch.
    l_all_new = jnp.concatenate(l_parts, axis=-1)
    acc_all_new = jnp.concatenate(acc_parts, axis=-1)
    m_ref[...] = jnp.concatenate(m_parts, axis=-1)
    l_ref[...] = l_all_new
    acc_ref[...] = acc_all_new

    @pl.when(kv == pl.num_programs(2) - 1)
    def _():
        # Finalize from the register values; 1/l via the EUP reciprocal slot.
        o_ref[0] = (acc_all_new *
                    pl.reciprocal(l_all_new, approx=True)).astype(o_ref.dtype)


def _pallas_flash_mha(q, k, v, num_heads, *, tq=None, tk=None):
    """q/k/v: bf16 (B, N, C). Returns bf16 (B, N, C) attention output."""
    B, N, C = q.shape
    head_dim = C // num_heads
    assert num_heads * head_dim == C and C % 128 == 0, \
        "channel dim must be num_heads*head_dim and a multiple of 128"
    tq = _pick_tile(N, (256, 128)) if tq is None else tq
    tk = _pick_tile(N, (256, 128)) if tk is None else tk
    nq, nk = N // tq, N // tk

    kern = functools.partial(_flash_attn_kernel, num_heads=num_heads,
                             head_dim=head_dim)
    # TODO(synk): on v5e, if xprof shows exposed DMA on the kv stream, add
    # pipeline_mode=pl.Buffered(3) to the k/v BlockSpecs; on v7x with B*nq < 2
    # consider flattening (B, nq) into one parallel axis for megacore balance.
    return pl.pallas_call(
        kern,
        out_shape=jax.ShapeDtypeStruct((B, N, C), jnp.bfloat16),
        grid_spec=pltpu.PrefetchScalarGridSpec(
            num_scalar_prefetch=0,
            grid=(B, nq, nk),
            in_specs=[
                pl.BlockSpec((1, tq, C), lambda b, qi, ki: (b, qi, 0)),
                pl.BlockSpec((1, tk, C), lambda b, qi, ki: (b, ki, 0)),
                pl.BlockSpec((1, tk, C), lambda b, qi, ki: (b, ki, 0)),
            ],
            out_specs=pl.BlockSpec((1, tq, C), lambda b, qi, ki: (b, qi, 0)),
            scratch_shapes=[
                pltpu.VMEM((tq, C), jnp.float32),   # running max (per-head strips)
                pltpu.VMEM((tq, C), jnp.float32),   # running softmax denom
                pltpu.VMEM((tq, C), jnp.float32),   # output accumulator
            ],
        ),
        compiler_params=pltpu.CompilerParams(
            dimension_semantics=("parallel", "parallel", "arbitrary"),
            vmem_limit_bytes=32 * 1024 * 1024,
        ),
    )(q, k, v)


# ----------------------------- module wrapper --------------------------------

class AttentionPallas:
    """Pallas port of the PyTorch `Attention` module forward pass."""

    def __init__(self, dim, num_heads=8, qkv_bias=False, key=jax.random.PRNGKey(0)):
        self.dim = dim
        self.num_heads = num_heads
        head_dim = dim // num_heads
        self.scale = head_dim ** (-0.5)

        k1, k2, k3, k4 = jax.random.split(key, 4)
        bound = 1.0 / (dim ** 0.5)
        # Torch-convention weights (out, in) for the pure-JAX reference path.
        self.w_qkv = jax.random.uniform(k1, (3 * dim, dim), jnp.float32, -bound, bound)
        self.b_qkv = (jax.random.uniform(k3, (3 * dim,), jnp.float32, -bound, bound)
                      if qkv_bias else jnp.zeros((3 * dim,), jnp.float32))
        self.w_proj = jax.random.uniform(k2, (dim, dim), jnp.float32, -bound, bound)
        self.b_proj = jax.random.uniform(k4, (dim,), jnp.float32, -bound, bound)

        # Kernel-side parameters, prepared ONCE:
        #  * (Cin, Cout) layout (pre-transposed),
        #  * softmax scale folded into the q output columns of the qkv proj,
        #  * weights pre-cast to bf16 (MXU inputs); biases stay f32.
        scale_vec = jnp.concatenate([
            jnp.full((dim,), self.scale, jnp.float32),
            jnp.ones((2 * dim,), jnp.float32),
        ])
        self.w_qkv_t = (self.w_qkv.T * scale_vec[None, :]).astype(jnp.bfloat16)
        self.b_qkv_scaled = self.b_qkv * scale_vec
        self.w_proj_t = self.w_proj.T.astype(jnp.bfloat16)
        # TODO(synk): attn_drop / proj_drop are 0.0 in the module defaults ->
        # identity; stochastic dropout not implemented.

    def __call__(self, x, H, W):
        # fused qkv projection -> three contiguous bf16 tensors (scale folded in)
        q, k, v = _pallas_qkv_proj(x, self.w_qkv_t, self.b_qkv_scaled)
        # flash attention with online softmax, bf16 output
        o = _pallas_flash_mha(q, k, v, self.num_heads)
        # output projection back to the input dtype
        return _pallas_linear(o, self.w_proj_t, self.b_proj, out_dtype=x.dtype)


# ----------------------------- reference (pure JAX) --------------------------

def _reference(x, mod):
    B, N, C = x.shape
    nh = mod.num_heads
    dh = C // nh
    qkv = x @ mod.w_qkv.T + mod.b_qkv
    qkv = qkv.reshape(B, N, 3, nh, dh).transpose(2, 0, 3, 1, 4)
    q, k, v = qkv[0], qkv[1], qkv[2]
    attn = jnp.einsum("bhqd,bhkd->bhqk", q, k) * mod.scale
    attn = jax.nn.softmax(attn, axis=-1)
    o = jnp.einsum("bhqk,bhkd->bhqd", attn, v)
    o = o.transpose(0, 2, 1, 3).reshape(B, N, C)
    return o @ mod.w_proj.T + mod.b_proj


if __name__ == "__main__":
    B, C = 2, 128              # dim = 128, num_heads = 8 -> head_dim = 16
    H, W = 16, 32
    N = H * W                  # 512 tokens -> 2 q-tiles x 2 kv-tiles at tq=tk=256
    num_heads = 8              # (exercises the online-softmax accumulation path)

    key = jax.random.PRNGKey(0)
    kx, kp = jax.random.split(key)
    x = jax.random.normal(kx, (B, N, C), jnp.float32)

    mod = AttentionPallas(dim=C, num_heads=num_heads, qkv_bias=True, key=kp)

    out = jax.block_until_ready(mod(x, H, W))

    ref = _reference(x, mod)
    assert out.shape == (B, N, C)
    # bf16 intermediates + approx reciprocal -> bf16-level tolerance.
    assert jnp.allclose(out, ref, atol=3e-2, rtol=3e-2), (
        "mismatch vs reference, max abs err = "
        f"{float(jnp.max(jnp.abs(out - ref)))}")
    print("KERNEL_OK")
</pallas_src>

<mosaic_0001>
module attributes {stable_mosaic.version = 11 : i64} {
  func.func @_qkv_linear_kernel(%arg0: i32, %arg1: i32, %arg2: memref<1x512x128xf32, #tpu.memory_space<vmem>>, %arg3: memref<128x384xbf16, #tpu.memory_space<vmem>>, %arg4: memref<1x384xf32, #tpu.memory_space<vmem>>, %arg5: memref<1x512x128xbf16, #tpu.memory_space<vmem>>, %arg6: memref<1x512x128xbf16, #tpu.memory_space<vmem>>, %arg7: memref<1x512x128xbf16, #tpu.memory_space<vmem>>) attributes {dimension_semantics = [#tpu.dimension_semantics<parallel>, #tpu.dimension_semantics<parallel>], iteration_bounds = array<i64: 2, 1>, scalar_prefetch = 0 : i64, scratch_operands = 0 : i64, tpu.core_type = #tpu.core_type<tc>, window_params = [{transform_indices = @transform_0, window_bounds = array<i64: 1, 512, 128>}, {pipeline_mode = #tpu.pipeline_mode<synchronous>, transform_indices = @transform_1, window_bounds = array<i64: 128, 384>}, {pipeline_mode = #tpu.pipeline_mode<synchronous>, transform_indices = @transform_2, window_bounds = array<i64: 1, 384>}, {transform_indices = @transform_3, window_bounds = array<i64: 1, 512, 128>}, {transform_indices = @transform_4, window_bounds = array<i64: 1, 512, 128>}, {transform_indices = @transform_5, window_bounds = array<i64: 1, 512, 128>}]} {
    %c0 = arith.constant 0 : index
    %c0_0 = arith.constant 0 : index
    %c0_1 = arith.constant 0 : index
    %0 = vector.load %arg2[%c0, %c0_0, %c0_1] : memref<1x512x128xf32, #tpu.memory_space<vmem>>, vector<1x512x128xf32>
    %1 = vector.shape_cast %0 : vector<1x512x128xf32> to vector<512x128xf32>
    %2 = arith.truncf %1 : vector<512x128xf32> to vector<512x128xbf16>
    %c0_2 = arith.constant 0 : index
    %c0_3 = arith.constant 0 : index
    %3 = vector.load %arg3[%c0_2, %c0_3] : memref<128x384xbf16, #tpu.memory_space<vmem>>, vector<128x384xbf16>
    %cst = arith.constant dense<0.000000e+00> : vector<512x384xf32>
    %4 = tpu.matmul %2, %3, %cst {dimension_numbers = #tpu.dot_dimension_numbers<[1], [0], [0], [1], [0, 0, 1, 1], [], []>} : vector<512x128xbf16>, vector<128x384xbf16>, vector<512x384xf32> -> vector<512x384xf32>
    %c0_4 = arith.constant 0 : index
    %c0_5 = arith.constant 0 : index
    %5 = vector.load %arg4[%c0_4, %c0_5] : memref<1x384xf32, #tpu.memory_space<vmem>>, vector<1x384xf32>
    %6 = vector.broadcast %5 : vector<1x384xf32> to vector<512x384xf32>
    %7 = arith.addf %4, %6 : vector<512x384xf32>
    %8 = vector.extract_strided_slice %7 {offsets = [0, 0], sizes = [512, 128], strides = [1, 1]} : vector<512x384xf32> to vector<512x128xf32>
    %9 = arith.truncf %8 : vector<512x128xf32> to vector<512x128xbf16>
    %c0_6 = arith.constant 0 : index
    %c0_7 = arith.constant 0 : index
    %c0_8 = arith.constant 0 : index
    %10 = vector.load %arg5[%c0_6, %c0_7, %c0_8] : memref<1x512x128xbf16, #tpu.memory_space<vmem>>, vector<1x512x128xbf16>
    %11 = vector.shape_cast %10 : vector<1x512x128xbf16> to vector<512x128xbf16>
    %12 = vector.shape_cast %9 : vector<512x128xbf16> to vector<1x512x128xbf16>
    tpu.vector_store %arg5[%c0_6, %c0_7, %c0_8], %12 {strides = array<i32>} : memref<1x512x128xbf16, #tpu.memory_space<vmem>>, vector<1x512x128xbf16>,
    %13 = vector.extract_strided_slice %7 {offsets = [0, 128], sizes = [512, 128], strides = [1, 1]} : vector<512x384xf32> to vector<512x128xf32>
    %14 = arith.truncf %13 : vector<512x128xf32> to vector<512x128xbf16>
    %c0_9 = arith.constant 0 : index
    %c0_10 = arith.constant 0 : index
    %c0_11 = arith.constant 0 : index
    %15 = vector.load %arg6[%c0_9, %c0_10, %c0_11] : memref<1x512x128xbf16, #tpu.memory_space<vmem>>, vector<1x512x128xbf16>
    %16 = vector.shape_cast %15 : vector<1x512x128xbf16> to vector<512x128xbf16>
    %17 = vector.shape_cast %14 : vector<512x128xbf16> to vector<1x512x128xbf16>
    tpu.vector_store %arg6[%c0_9, %c0_10, %c0_11], %17 {strides = array<i32>} : memref<1x512x128xbf16, #tpu.memory_space<vmem>>, vector<1x512x128xbf16>,
    %18 = vector.extract_strided_slice %7 {offsets = [0, 256], sizes = [512, 128], strides = [1, 1]} : vector<512x384xf32> to vector<512x128xf32>
    %19 = arith.truncf %18 : vector<512x128xf32> to vector<512x128xbf16>
    %c0_12 = arith.constant 0 : index
    %c0_13 = arith.constant 0 : index
    %c0_14 = arith.constant 0 : index
    %20 = vector.load %arg7[%c0_12, %c0_13, %c0_14] : memref<1x512x128xbf16, #tpu.memory_space<vmem>>, vector<1x512x128xbf16>
    %21 = vector.shape_cast %20 : vector<1x512x128xbf16> to vector<512x128xbf16>
    %22 = vector.shape_cast %19 : vector<512x128xbf16> to vector<1x512x128xbf16>
    tpu.vector_store %arg7[%c0_12, %c0_13, %c0_14], %22 {strides = array<i32>} : memref<1x512x128xbf16, #tpu.memory_space<vmem>>, vector<1x512x128xbf16>,
    return
  }
  func.func @transform_0(%arg0: i32, %arg1: i32) -> (i32, i32, i32) {
    %c0_i32 = arith.constant 0 : i32
    %c0_i32_0 = arith.constant 0 : i32
    return %arg0, %arg1, %c0_i32 : i32, i32, i32
  }
  func.func @transform_1(%arg0: i32, %arg1: i32) -> (i32, i32) {
    %c0_i32 = arith.constant 0 : i32
    %c0_i32_0 = arith.constant 0 : i32
    %c0_i32_1 = arith.constant 0 : i32
    return %c0_i32, %c0_i32_0 : i32, i32
  }
  func.func @transform_2(%arg0: i32, %arg1: i32) -> (i32, i32) {
    %c0_i32 = arith.constant 0 : i32
    %c0_i32_0 = arith.constant 0 : i32
    %c0_i32_1 = arith.constant 0 : i32
    return %c0_i32, %c0_i32_0 : i32, i32
  }
  func.func @transform_3(%arg0: i32, %arg1: i32) -> (i32, i32, i32) {
    %c0_i32 = arith.constant 0 : i32
    %c0_i32_0 = arith.constant 0 : i32
    return %arg0, %arg1, %c0_i32 : i32, i32, i32
  }
  func.func @transform_4(%arg0: i32, %arg1: i32) -> (i32, i32, i32) {
    %c0_i32 = arith.constant 0 : i32
    %c0_i32_0 = arith.constant 0 : i32
    return %arg0, %arg1, %c0_i32 : i32, i32, i32
  }
  func.func @transform_5(%arg0: i32, %arg1: i32) -> (i32, i32, i32) {
    %c0_i32 = arith.constant 0 : i32
    %c0_i32_0 = arith.constant 0 : i32
    return %arg0, %arg1, %c0_i32 : i32, i32, i32
  }
}

</mosaic_0001>

<llo_original>
// kernel: tpu_custom_call.1
$region0: #{tpu_custom_call.1}
  #allocation0 [shape = 'u32[]', space=smem, size = 0x4, offset = 0x4, fixed_abs, tag = 'smem constant byte address 0x4 - core index']
  #allocation1 [shape = 'u32[72,128]{1,0:T(1,128)}', space=vmem, size = 0x9000, scoped, tag = 'internal scratch']
  %s0 = inlined_call_operand.hbm [shape: f32[2,512,128], index: 0, kind: input, shape index: {}]
  %s1 = inlined_call_operand.hbm [shape: bf16[128,384], index: 1, kind: input, shape index: {}]
  %s2 = inlined_call_operand.hbm [shape: f32[1,384], index: 2, kind: input, shape index: {}]
  %s3 = inlined_call_operand.hbm [shape: bf16[2,512,128], index: 3, kind: output, shape index: {0}]
  %s4 = inlined_call_operand.hbm [shape: bf16[2,512,128], index: 4, kind: output, shape index: {1}]
  %s5 = inlined_call_operand.hbm [shape: bf16[2,512,128], index: 5, kind: output, shape index: {2}]
  %6 = xla_tuple %s3, %s4, %s5
  %s7 = sld [smem:[#allocation0]]
  $region73: #{tpu_custom_call.1} parent=0
    _
  %s9 = ssub.s32 1, %s7
  %s10 = scalar_select 0, %s9, %s7
  $region1: #{tpu_custom_call.1} parent=0
    #allocation2 [shape = 'u8[524288]{0}', space=vmem, size = 0x80000, scoped, tag = 'input window, operand 0']
    #allocation3 [shape = 's32[2]{0}', space=sflag, size = 0x8, scoped, tag = 'scoped memory for tpu_custom_call.1']
    #allocation4 [shape = 's32[2]{0}', space=sflag, size = 0x8, scoped, tag = 'scoped memory for tpu_custom_call.1']
    #allocation5 [shape = 'u8[98304]{0}', space=vmem, size = 0x18000, scoped, tag = 'input window, operand 1, single buffered']
    #allocation6 [shape = 's32[1]{0}', space=sflag, size = 0x4, scoped, tag = 'scoped memory for tpu_custom_call.1']
    #allocation7 [shape = 'u8[1536]{0}', space=vmem, size = 0x800, scoped, tag = 'input window, operand 2, single buffered']
    #allocation8 [shape = 'u8[262144]{0}', space=vmem, size = 0x40000, scoped, tag = 'output window, operand 0']
    #allocation9 [shape = 'u8[262144]{0}', space=vmem, size = 0x40000, scoped, tag = 'output window, operand 1']
    #allocation10 [shape = 's32[2]{0}', space=sflag, size = 0x8, scoped, tag = 'scoped memory for tpu_custom_call.1']
    #allocation11 [shape = 'u8[262144]{0}', space=vmem, size = 0x40000, scoped, tag = 'output window, operand 2']
    %11 = vsyncpa [#allocation3], 0
    %s12 = scalar_lea.sflag [#allocation3], 1
    %13 = vsyncpa %s12, 0
    %14 = vsyncpa [#allocation6], 0
    %15 = vsyncpa [#allocation4], 0
    %s16 = scalar_lea.sflag [#allocation4], 1
    %17 = vsyncpa %s16, 0
    %18 = vsyncpa [#allocation10], 0
    %s19 = scalar_lea.sflag [#allocation10], 1
    %20 = vsyncpa %s19, 0
    loop: start=0, step=1, limit=4
    $region2: #{tpu_custom_call.1} parent=1 // loop_pre_header
      _
    $region3: #{tpu_custom_call.1} parent=1 // loop_header
      %s22 = sphi 0, %s26
      %p23 = scmp.ge.s32.totalorder %s22, 4
      %s29 = sphi 0, %s41
      %s30 = sphi 0, %s37
      %s31 = sphi 0, %s29
      %s32 = sphi 0, %s30
      %s33 = sphi 0, %s31
      %s34 = sphi 0, %s32
      %s46 = sphi 0, %s48
      %s49 = sphi 0, %s46
      %s50 = sphi 0, %s49
      %s66 = sphi 0, %s50
      %s70 = sphi 0, %s70
      %s72 = sphi 0, %s70
      %s73 = sphi 0, %s72
      %s87 = sphi 0, %s73
      %s91 = sphi 0, %s91
      %s93 = sphi 0, %s91
      %s94 = sphi 0, %s93
      %s108 = sphi 0, %s94
      %s116 = sphi 0, %s118
      %s119 = sphi 0, %s116
      %s120 = sphi 0, %s119
      %s136 = sphi 0, %s120
      %s144 = sphi 0, %s146
      %s147 = sphi 0, %s144
      %s148 = sphi 0, %s147
      %s164 = sphi 0, %s148
      %s172 = sphi 0, %s174
      %s175 = sphi 0, %s172
      %s176 = sphi 0, %s175
      %s192 = sphi 0, %s176
    $region4: #{tpu_custom_call.1} parent=1 // loop_header_branch
      %25 = sbr.rel (%p23) target = $region8
    $region5: #{tpu_custom_call.1} parent=1 // loop_body
      %s27 = ssub.s32 %s22, 1
      %s28 = ssub.s32 %s22, 2
      %s35 = sadd.s32 1, %s30
      %p36 = scmp.ge.s32.totalorder %s35, 1
      %s37 = scalar_select %p36, 0, %s35
      %s38 = sadd.s32 1, %s29
      %s39 = scalar_select %p36, %s38, %s29
      %p40 = scmp.ge.s32.totalorder %s39, 2
      %s41 = scalar_select %p40, 0, %s39
      %s42 = ssub.s32 %s29, %s41
      %s43 = ssub.s32 %s30, %s37
      %s44 = sor.u32 %s42, %s43
      %p45 = scmp.eq.s32.totalorder %s44, 0
      %s47 = sadd.s32 %s46, 1
      %s48 = scalar_select %p45, %s46, %s47
      %p51 = pneg %p45
      %p52 = scmp.eq.s32.totalorder %s22, 1
      %p53 = por %p51, %p52
      %p54 = scmp.ne.s32.totalorder %s46, %s49
      %p55 = scmp.eq.s32.totalorder %s22, 0
      %p56 = por %p54, %p55
      %p57 = scmp.ne.s32.totalorder %s46, %s49
      %p58 = scmp.eq.s32.totalorder %s27, 1
      %p59 = por %p57, %p58
      %p60 = scmp.ne.s32.totalorder %s49, %s50
      %p61 = scmp.eq.s32.totalorder %s27, 0
      %p62 = por %p60, %p61
      %p63 = scmp.ne.s32.totalorder %s49, %s50
      %p64 = scmp.eq.s32.totalorder %s28, 1
      %p65 = por %p63, %p64
      %p67 = scmp.ne.s32.totalorder %s50, %s66
      %p68 = scmp.eq.s32.totalorder %s28, 0
      %p69 = por %p67, %p68
      %s71 = sadd.s32 %s70, 1
      %p74 = scmp.eq.s32.totalorder %s22, 1
      %p75 = scmp.ne.s32.totalorder %s70, %s72
      %p76 = scmp.eq.s32.totalorder %s22, 0
      %p77 = por %p75, %p76
      %p78 = scmp.ne.s32.totalorder %s70, %s72
      %p79 = scmp.eq.s32.totalorder %s27, 1
      %p80 = por %p78, %p79
      %p81 = scmp.ne.s32.totalorder %s72, %s73
      %p82 = scmp.eq.s32.totalorder %s27, 0
      %p83 = por %p81, %p82
      %p84 = scmp.ne.s32.totalorder %s72, %s73
      %p85 = scmp.eq.s32.totalorder %s28, 1
      %p86 = por %p84, %p85
      %p88 = scmp.ne.s32.totalorder %s73, %s87
      %p89 = scmp.eq.s32.totalorder %s28, 0
      %p90 = por %p88, %p89
      %s92 = sadd.s32 %s91, 1
      %p95 = scmp.eq.s32.totalorder %s22, 1
      %p96 = scmp.ne.s32.totalorder %s91, %s93
      %p97 = scmp.eq.s32.totalorder %s22, 0
      %p98 = por %p96, %p97
      %p99 = scmp.ne.s32.totalorder %s91, %s93
      %p100 = scmp.eq.s32.totalorder %s27, 1
      %p101 = por %p99, %p100
      %p102 = scmp.ne.s32.totalorder %s93, %s94
      %p103 = scmp.eq.s32.totalorder %s27, 0
      %p104 = por %p102, %p103
      %p105 = scmp.ne.s32.totalorder %s93, %s94
      %p106 = scmp.eq.s32.totalorder %s28, 1
      %p107 = por %p105, %p106
      %p109 = scmp.ne.s32.totalorder %s94, %s108
      %p110 = scmp.eq.s32.totalorder %s28, 0
      %p111 = por %p109, %p110
      %s112 = ssub.s32 %s29, %s41
      %s113 = ssub.s32 %s30, %s37
      %s114 = sor.u32 %s112, %s113
      %p115 = scmp.eq.s32.totalorder %s114, 0
      %s117 = sadd.s32 %s116, 1
      %s118 = scalar_select %p115, %s116, %s117
      %p121 = pneg %p115
      %p122 = scmp.eq.s32.totalorder %s22, 1
      %p123 = por %p121, %p122
      %p124 = scmp.ne.s32.totalorder %s116, %s119
      %p125 = scmp.eq.s32.totalorder %s22, 0
      %p126 = por %p124, %p125
      %p127 = scmp.ne.s32.totalorder %s116, %s119
      %p128 = scmp.eq.s32.totalorder %s27, 1
      %p129 = por %p127, %p128
      %p130 = scmp.ne.s32.totalorder %s119, %s120
      %p131 = scmp.eq.s32.totalorder %s27, 0
      %p132 = por %p130, %p131
      %p133 = scmp.ne.s32.totalorder %s119, %s120
      %p134 = scmp.eq.s32.totalorder %s28, 1
      %p135 = por %p133, %p134
      %p137 = scmp.ne.s32.totalorder %s120, %s136
      %p138 = scmp.eq.s32.totalorder %s28, 0
      %p139 = por %p137, %p138
      %s140 = ssub.s32 %s29, %s41
      %s141 = ssub.s32 %s30, %s37
      %s142 = sor.u32 %s140, %s141
      %p143 = scmp.eq.s32.totalorder %s142, 0
      %s145 = sadd.s32 %s144, 1
      %s146 = scalar_select %p143, %s144, %s145
      %p149 = pneg %p143
      %p150 = scmp.eq.s32.totalorder %s22, 1
      %p151 = por %p149, %p150
      %p152 = scmp.ne.s32.totalorder %s144, %s147
      %p153 = scmp.eq.s32.totalorder %s22, 0
      %p154 = por %p152, %p153
      %p155 = scmp.ne.s32.totalorder %s144, %s147
      %p156 = scmp.eq.s32.totalorder %s27, 1
      %p157 = por %p155, %p156
      %p158 = scmp.ne.s32.totalorder %s147, %s148
      %p159 = scmp.eq.s32.totalorder %s27, 0
      %p160 = por %p158, %p159
      %p161 = scmp.ne.s32.totalorder %s147, %s148
      %p162 = scmp.eq.s32.totalorder %s28, 1
      %p163 = por %p161, %p162
      %p165 = scmp.ne.s32.totalorder %s148, %s164
      %p166 = scmp.eq.s32.totalorder %s28, 0
      %p167 = por %p165, %p166
      %s168 = ssub.s32 %s29, %s41
      %s169 = ssub.s32 %s30, %s37
      %s170 = sor.u32 %s168, %s169
      %p171 = scmp.eq.s32.totalorder %s170, 0
      %s173 = sadd.s32 %s172, 1
      %s174 = scalar_select %p171, %s172, %s173
      %p177 = pneg %p171
      %p178 = scmp.eq.s32.totalorder %s22, 1
      %p179 = por %p177, %p178
      %p180 = scmp.ne.s32.totalorder %s172, %s175
      %p181 = scmp.eq.s32.totalorder %s22, 0
      %p182 = por %p180, %p181
      %p183 = scmp.ne.s32.totalorder %s172, %s175
      %p184 = scmp.eq.s32.totalorder %s27, 1
      %p185 = por %p183, %p184
      %p186 = scmp.ne.s32.totalorder %s175, %s176
      %p187 = scmp.eq.s32.totalorder %s27, 0
      %p188 = por %p186, %p187
      %p189 = scmp.ne.s32.totalorder %s175, %s176
      %p190 = scmp.eq.s32.totalorder %s28, 1
      %p191 = por %p189, %p190
      %p193 = scmp.ne.s32.totalorder %s176, %s192
      %p194 = scmp.eq.s32.totalorder %s28, 0
      %p195 = por %p193, %p194
      %p196 = scmp.le.s32.totalorder 1, %s22
      %p197 = scmp.lt.s32.totalorder %s22, 3
      %p198 = pnand %p196, %p197
      %p199 = pneg %p198
      // Predicated region
      $region9: #{tpu_custom_call.1} parent=5 // pred_check
        _
      $region10: #{tpu_custom_call.1} parent=5 // pred_check_branch
        %201 = sbr.rel (%p198) target = $region12
      $region11: #{tpu_custom_call.1} parent=5 // pred_region
        %s202 = ssub.s32 %s22, 1
        // Predicated region
        $region13: #{tpu_custom_call.1} parent=11 // pred_check
          %p203 = pneg %p83
        $region14: #{tpu_custom_call.1} parent=11 // pred_check_branch
          %205 = sbr.rel (%p203) target = $region16
        $region15: #{tpu_custom_call.1} parent=11 // pred_region
          %207 = vsyncadd [#allocation6], 0
          %s208 = sshll.u32 %s1, 4
          %s209 = int_to_ptr.hbm [resolvable:$true] %s208
          %s210 = sshll.u32 [#allocation5], 4
          %s211 = int_to_ptr.vmem [resolvable:$true] %s210
          %216 = dma.hbm_to_vmem [thread:$0]  %s209, 3072, %s211, [#allocation6], 192, 192, 12
        $region16: #{tpu_custom_call.1} parent=11 // pred_fallthru
          _
        // Predicated region
        $region17: #{tpu_custom_call.1} parent=11 // pred_check
          %p217 = pneg %p104
        $region18: #{tpu_custom_call.1} parent=11 // pred_check_branch
          %219 = sbr.rel (%p217) target = $region20
        $region19: #{tpu_custom_call.1} parent=11 // pred_region
          %221 = vsyncadd [#allocation6], 0
          %s223 = sshll.u32 %s2, 4
          %s224 = int_to_ptr.hbm [resolvable:$true] %s223
          %s225 = sshll.u32 [#allocation7], 4
          %s226 = int_to_ptr.vmem [resolvable:$true] %s225
          %228 = dma.hbm_to_vmem [thread:$0]  %s224, 48, %s226, [#allocation6]
        $region20: #{tpu_custom_call.1} parent=11 // pred_fallthru
          _
      $region12: #{tpu_custom_call.1} parent=5 // pred_fallthru
        _
      %p229 = scmp.lt.s32.totalorder %s22, 2
      // Predicated region
      $region21: #{tpu_custom_call.1} parent=5 // pred_check
        %p230 = pneg %p229
      $region22: #{tpu_custom_call.1} parent=5 // pred_check_branch
        %232 = sbr.rel (%p230) target = $region24
      $region23: #{tpu_custom_call.1} parent=5 // pred_region
        // Predicated region
        $region25: #{tpu_custom_call.1} parent=23 // pred_check
          %p233 = pneg %p56
        $region26: #{tpu_custom_call.1} parent=23 // pred_check_branch
          %235 = sbr.rel (%p233) target = $region28
        $region27: #{tpu_custom_call.1} parent=23 // pred_region
          %s236 = sand.u32 %s46, 1
          %s237 = scalar_lea.sflag [#allocation3], %s236
          %s238 = sand.u32 %s46, 1
          %s239 = smul.addr %s238, 512
          %s240 = scalar_lea.vmem [#allocation2], %s239
          %s241 = smul.u32 64, %s30
          %243 = vsyncadd %s237, 0
          %s244 = smul.addr %s29, 64
          %s245 = sadd.s32 %s241, %s244
          %s246 = smul.addr %s245, 8
          %s247 = scalar_lea.hbm %s0, %s246
          %s248 = sshll.u32 %s247, 4
          %s249 = int_to_ptr.hbm [resolvable:$true] %s248
          %s250 = sshll.u32 %s240, 4
          %s251 = int_to_ptr.vmem [resolvable:$true] %s250
          %256 = dma.hbm_to_vmem [thread:$0]  %s249, 8192, %s251, %s237, 128, 128, 8
        $region28: #{tpu_custom_call.1} parent=23 // pred_fallthru
          _
      $region24: #{tpu_custom_call.1} parent=5 // pred_fallthru
        _
      %p257 = scmp.le.s32.totalorder 1, %s22
      %p258 = scmp.lt.s32.totalorder %s22, 3
      %p259 = pnand %p257, %p258
      %p260 = pneg %p259
      // Predicated region
      $region29: #{tpu_custom_call.1} parent=5 // pred_check
        _
      $region30: #{tpu_custom_call.1} parent=5 // pred_check_branch
        %262 = sbr.rel (%p259) target = $region32
      $region31: #{tpu_custom_call.1} parent=5 // pred_region
        %s263 = ssub.s32 %s22, 1
        %s264 = sand.u32 %s49, 1
        %s265 = scalar_lea.sflag [#allocation3], %s264
        %s266 = sand.u32 %s49, 1
        %s267 = smul.addr %s266, 512
        %s268 = scalar_lea.vmem [#allocation2], %s267
        // Predicated region
        $region33: #{tpu_custom_call.1} parent=31 // pred_check
          %p269 = pneg %p62
        $region34: #{tpu_custom_call.1} parent=31 // pred_check_branch
          %271 = sbr.rel (%p269) target = $region36
        $region35: #{tpu_custom_call.1} parent=31 // pred_region
          %273 = dma.done %s265, 8192
        $region36: #{tpu_custom_call.1} parent=31 // pred_fallthru
          _
        // Predicated region
        $region37: #{tpu_custom_call.1} parent=31 // pred_check
          %p274 = pneg %p83
        $region38: #{tpu_custom_call.1} parent=31 // pred_check_branch
          %276 = sbr.rel (%p274) target = $region40
        $region39: #{tpu_custom_call.1} parent=31 // pred_region
          %278 = dma.done [#allocation6], 3072
        $region40: #{tpu_custom_call.1} parent=31 // pred_fallthru
          _
        // Predicated region
        $region41: #{tpu_custom_call.1} parent=31 // pred_check
          %p279 = pneg %p104
        $region42: #{tpu_custom_call.1} parent=31 // pred_check_branch
          %281 = sbr.rel (%p279) target = $region44
        $region43: #{tpu_custom_call.1} parent=31 // pred_region
          %283 = dma.done [#allocation6], 48
        $region44: #{tpu_custom_call.1} parent=31 // pred_fallthru
          _
        %s284 = sand.u32 %s49, 1
        %s285 = scalar_lea.sflag [#allocation3], %s284
        %s286 = sand.u32 %s49, 1
        %s287 = smul.addr %s286, 512
        %s288 = scalar_lea.vmem [#allocation2], %s287
        %p289 = pneg %p62
        %p290 = pneg %p59
        %p291 = pneg %p83
        %p292 = pneg %p80
        %p293 = pneg %p104
        %p294 = pneg %p101
        %p295 = pneg %p132
        %p296 = pneg %p129
        %s297 = sand.u32 %s119, 1
        %s298 = scalar_lea.sflag [#allocation4], %s297
        %s299 = sand.u32 %s119, 1
        %s300 = smul.addr %s299, 256
        %s301 = scalar_lea.vmem [#allocation8], %s300
        %p302 = pneg %p160
        %p303 = pneg %p157
        %s304 = sand.u32 %s27, 1
        %s305 = scalar_lea.sflag [#allocation10], %s304
        %s306 = sand.u32 %s147, 1
        %s307 = smul.addr %s306, 256
        %s308 = scalar_lea.vmem [#allocation9], %s307
        %p309 = pneg %p188
        %p310 = pneg %p185
        %s311 = sand.u32 %s27, 1
        %s312 = scalar_lea.sflag [#allocation10], %s311
        %s313 = sand.u32 %s175, 1
        %s314 = smul.addr %s313, 256
        %s315 = scalar_lea.vmem [#allocation11], %s314
        %s316 = smul.u32 64, %s32
        %s317 = smul.u32 64, %s32
        %s318 = smul.u32 64, %s32
        %s319 = smul.u32 64, %s32
        %v320 = vld [vmem:[%s268] sm:$0xff]
        %v321 = vld [vmem:[%s268 + $0x8] sm:$0xff]
        %v322 = vld [vmem:[%s268 + $0x10] sm:$0xff]
        %v323 = vld [vmem:[%s268 + $0x18] sm:$0xff]
        %v324 = vld [vmem:[%s268 + $0x20] sm:$0xff]
        %v325 = vld [vmem:[%s268 + $0x28] sm:$0xff]
        %v326 = vld [vmem:[%s268 + $0x30] sm:$0xff]
        %v327 = vld [vmem:[%s268 + $0x38] sm:$0xff]
        %v328 = vld [vmem:[%s268 + $0x40] sm:$0xff]
        %v329 = vld [vmem:[%s268 + $0x48] sm:$0xff]
        %v330 = vld [vmem:[%s268 + $0x50] sm:$0xff]
        %v331 = vld [vmem:[%s268 + $0x58] sm:$0xff]
        %v332 = vld [vmem:[%s268 + $0x60] sm:$0xff]
        %v333 = vld [vmem:[%s268 + $0x68] sm:$0xff]
        %v334 = vld [vmem:[%s268 + $0x70] sm:$0xff]
        %v335 = vld [vmem:[%s268 + $0x78] sm:$0xff]
        %v336 = vld [vmem:[%s268 + $0x80] sm:$0xff]
        %v337 = vld [vmem:[%s268 + $0x88] sm:$0xff]
        %v338 = vld [vmem:[%s268 + $0x90] sm:$0xff]
        %v339 = vld [vmem:[%s268 + $0x98] sm:$0xff]
        %v340 = vld [vmem:[%s268 + $0xa0] sm:$0xff]
        %v341 = vld [vmem:[%s268 + $0xa8] sm:$0xff]
        %v342 = vld [vmem:[%s268 + $0xb0] sm:$0xff]
        %v343 = vld [vmem:[%s268 + $0xb8] sm:$0xff]
        %v344 = vld [vmem:[%s268 + $0xc0] sm:$0xff]
        %v345 = vld [vmem:[%s268 + $0xc8] sm:$0xff]
        %v346 = vld [vmem:[%s268 + $0xd0] sm:$0xff]
        %v347 = vld [vmem:[%s268 + $0xd8] sm:$0xff]
        %v348 = vld [vmem:[%s268 + $0xe0] sm:$0xff]
        %v349 = vld [vmem:[%s268 + $0xe8] sm:$0xff]
        %v350 = vld [vmem:[%s268 + $0xf0] sm:$0xff]
        %v351 = vld [vmem:[%s268 + $0xf8] sm:$0xff]
        %v352 = vld [vmem:[%s268 + $0x100] sm:$0xff]
        %v353 = vld [vmem:[%s268 + $0x108] sm:$0xff]
        %v354 = vld [vmem:[%s268 + $0x110] sm:$0xff]
        %v355 = vld [vmem:[%s268 + $0x118] sm:$0xff]
        %v356 = vld [vmem:[%s268 + $0x120] sm:$0xff]
        %v357 = vld [vmem:[%s268 + $0x128] sm:$0xff]
        %v358 = vld [vmem:[%s268 + $0x130] sm:$0xff]
        %v359 = vld [vmem:[%s268 + $0x138] sm:$0xff]
        %v360 = vld [vmem:[%s268 + $0x140] sm:$0xff]
        %v361 = vld [vmem:[%s268 + $0x148] sm:$0xff]
        %v362 = vld [vmem:[%s268 + $0x150] sm:$0xff]
        %v363 = vld [vmem:[%s268 + $0x158] sm:$0xff]
        %v364 = vld [vmem:[%s268 + $0x160] sm:$0xff]
        %v365 = vld [vmem:[%s268 + $0x168] sm:$0xff]
        %v366 = vld [vmem:[%s268 + $0x170] sm:$0xff]
        %v367 = vld [vmem:[%s268 + $0x178] sm:$0xff]
        %v368 = vld [vmem:[%s268 + $0x180] sm:$0xff]
        %v369 = vld [vmem:[%s268 + $0x188] sm:$0xff]
        %v370 = vld [vmem:[%s268 + $0x190] sm:$0xff]
        %v371 = vld [vmem:[%s268 + $0x198] sm:$0xff]
        %v372 = vld [vmem:[%s268 + $0x1a0] sm:$0xff]
        %v373 = vld [vmem:[%s268 + $0x1a8] sm:$0xff]
        %v374 = vld [vmem:[%s268 + $0x1b0] sm:$0xff]
        %v375 = vld [vmem:[%s268 + $0x1b8] sm:$0xff]
        %v376 = vld [vmem:[%s268 + $0x1c0] sm:$0xff]
        %v377 = vld [vmem:[%s268 + $0x1c8] sm:$0xff]
        %v378 = vld [vmem:[%s268 + $0x1d0] sm:$0xff]
        %v379 = vld [vmem:[%s268 + $0x1d8] sm:$0xff]
        %v380 = vld [vmem:[%s268 + $0x1e0] sm:$0xff]
        %v381 = vld [vmem:[%s268 + $0x1e8] sm:$0xff]
        %v382 = vld [vmem:[%s268 + $0x1f0] sm:$0xff]
        %v383 = vld [vmem:[%s268 + $0x1f8] sm:$0xff]
        %v384 = vpack.c.bf16 %v321, %v320
        %v385 = vpack.c.bf16 %v323, %v322
        %v386 = vpack.c.bf16 %v325, %v324
        %v387 = vpack.c.bf16 %v327, %v326
        %v388 = vpack.c.bf16 %v329, %v328
        %v389 = vpack.c.bf16 %v331, %v330
        %v390 = vpack.c.bf16 %v333, %v332
        %v391 = vpack.c.bf16 %v335, %v334
        %v392 = vpack.c.bf16 %v337, %v336
        %v393 = vpack.c.bf16 %v339, %v338
        %v394 = vpack.c.bf16 %v341, %v340
        %v395 = vpack.c.bf16 %v343, %v342
        %v396 = vpack.c.bf16 %v345, %v344
        %v397 = vpack.c.bf16 %v347, %v346
        %v398 = vpack.c.bf16 %v349, %v348
        %v399 = vpack.c.bf16 %v351, %v350
        %v400 = vpack.c.bf16 %v353, %v352
        %v401 = vpack.c.bf16 %v355, %v354
        %v402 = vpack.c.bf16 %v357, %v356
        %v403 = vpack.c.bf16 %v359, %v358
        %v404 = vpack.c.bf16 %v361, %v360
        %v405 = vpack.c.bf16 %v363, %v362
        %v406 = vpack.c.bf16 %v365, %v364
        %v407 = vpack.c.bf16 %v367, %v366
        %v408 = vpack.c.bf16 %v369, %v368
        %v409 = vpack.c.bf16 %v371, %v370
        %v410 = vpack.c.bf16 %v373, %v372
        %v411 = vpack.c.bf16 %v375, %v374
        %v412 = vpack.c.bf16 %v377, %v376
        %v413 = vpack.c.bf16 %v379, %v378
        %v414 = vpack.c.bf16 %v381, %v380
        %v415 = vpack.c.bf16 %v383, %v382
        %v416 = vld [vmem:[#allocation5] sm:$0xff]
        %v417 = vld [vmem:[#allocation5 + $0x8] sm:$0xf]
        %v418 = vld [vmem:[#allocation5 + $0xc] sm:$0xff]
        %v419 = vld [vmem:[#allocation5 + $0x14] sm:$0xf]
        %v420 = vld [vmem:[#allocation5 + $0x18] sm:$0xff]
        %v421 = vld [vmem:[#allocation5 + $0x20] sm:$0xf]
        %v422 = vld [vmem:[#allocation5 + $0x24] sm:$0xff]
        %v423 = vld [vmem:[#allocation5 + $0x2c] sm:$0xf]
        %v424 = vld [vmem:[#allocation5 + $0x30] sm:$0xff]
        %v425 = vld [vmem:[#allocation5 + $0x38] sm:$0xf]
        %v426 = vld [vmem:[#allocation5 + $0x3c] sm:$0xff]
        %v427 = vld [vmem:[#allocation5 + $0x44] sm:$0xf]
        %v428 = vld [vmem:[#allocation5 + $0x48] sm:$0xff]
        %v429 = vld [vmem:[#allocation5 + $0x50] sm:$0xf]
        %v430 = vld [vmem:[#allocation5 + $0x54] sm:$0xff]
        %v431 = vld [vmem:[#allocation5 + $0x5c] sm:$0xf]
        %v432 = vld [vmem:[#allocation5 + $0x60] sm:$0xff]
        %v433 = vld [vmem:[#allocation5 + $0x68] sm:$0xf]
        %v434 = vld [vmem:[#allocation5 + $0x6c] sm:$0xff]
        %v435 = vld [vmem:[#allocation5 + $0x74] sm:$0xf]
        %v436 = vld [vmem:[#allocation5 + $0x78] sm:$0xff]
        %v437 = vld [vmem:[#allocation5 + $0x80] sm:$0xf]
        %v438 = vld [vmem:[#allocation5 + $0x84] sm:$0xff]
        %v439 = vld [vmem:[#allocation5 + $0x8c] sm:$0xf]
        %v440 = vld [vmem:[#allocation5 + $0x90] sm:$0xff]
        %v441 = vld [vmem:[#allocation5 + $0x98] sm:$0xf]
        %v442 = vld [vmem:[#allocation5 + $0x9c] sm:$0xff]
        %v443 = vld [vmem:[#allocation5 + $0xa4] sm:$0xf]
        %v444 = vld [vmem:[#allocation5 + $0xa8] sm:$0xff]
        %v445 = vld [vmem:[#allocation5 + $0xb0] sm:$0xf]
        %v446 = vld [vmem:[#allocation5 + $0xb4] sm:$0xff]
        %v447 = vld [vmem:[#allocation5 + $0xbc] sm:$0xf]
        %v448 = vld [vmem:[#allocation7] sm:$0x7]
        %v450 = vperm.slane %v448, 0
        %v451 = vperm.slane %v448, 1
        %v452 = vperm.slane %v448, 2
        %v488 = vunpack.c.l.b16 %v416
        %v489 = vunpack.c.h.b16 %v416
        %v490 = vunpack.c.l.b16 %v417
        %v491 = vunpack.c.l.b16 %v418
        %v492 = vunpack.c.h.b16 %v418
        %v493 = vunpack.c.l.b16 %v419
        %v494 = vunpack.c.l.b16 %v420
        %v495 = vunpack.c.h.b16 %v420
        %v496 = vunpack.c.l.b16 %v421
        %v497 = vunpack.c.l.b16 %v422
        %v498 = vunpack.c.h.b16 %v422
        %v499 = vunpack.c.l.b16 %v423
        %v500 = vunpack.c.l.b16 %v424
        %v501 = vunpack.c.h.b16 %v424
        %v502 = vunpack.c.l.b16 %v425
        %v503 = vunpack.c.l.b16 %v426
        %v504 = vunpack.c.h.b16 %v426
        %v505 = vunpack.c.l.b16 %v427
        %v506 = vunpack.c.l.b16 %v428
        %v507 = vunpack.c.h.b16 %v428
        %v508 = vunpack.c.l.b16 %v429
        %v509 = vunpack.c.l.b16 %v430
        %v510 = vunpack.c.h.b16 %v430
        %v511 = vunpack.c.l.b16 %v431
        %v512 = vunpack.c.l.b16 %v432
        %v513 = vunpack.c.h.b16 %v432
        %v514 = vunpack.c.l.b16 %v433
        %v515 = vunpack.c.l.b16 %v434
        %v516 = vunpack.c.h.b16 %v434
        %v517 = vunpack.c.l.b16 %v435
        %v518 = vunpack.c.l.b16 %v436
        %v519 = vunpack.c.h.b16 %v436
        %v520 = vunpack.c.l.b16 %v437
        %v521 = vunpack.c.l.b16 %v438
        %v522 = vunpack.c.h.b16 %v438
        %v523 = vunpack.c.l.b16 %v439
        %v524 = vunpack.c.l.b16 %v440
        %v525 = vunpack.c.h.b16 %v440
        %v526 = vunpack.c.l.b16 %v441
        %v527 = vunpack.c.l.b16 %v442
        %v528 = vunpack.c.h.b16 %v442
        %v529 = vunpack.c.l.b16 %v443
        %v530 = vunpack.c.l.b16 %v444
        %v531 = vunpack.c.h.b16 %v444
        %v532 = vunpack.c.l.b16 %v445
        %v533 = vunpack.c.l.b16 %v446
        %v534 = vunpack.c.h.b16 %v446
        %v535 = vunpack.c.l.b16 %v447
        %v536 = vpack.c.b16 %v491, %v488
        %v537 = vpack.c.b16 %v492, %v489
        %v538 = vpack.c.b16 %v493, %v490
        %v539 = vpack.c.b16 %v497, %v494
        %v540 = vpack.c.b16 %v498, %v495
        %v541 = vpack.c.b16 %v499, %v496
        %v542 = vpack.c.b16 %v503, %v500
        %v543 = vpack.c.b16 %v504, %v501
        %v544 = vpack.c.b16 %v505, %v502
        %v545 = vpack.c.b16 %v509, %v506
        %v546 = vpack.c.b16 %v510, %v507
        %v547 = vpack.c.b16 %v511, %v508
        %v548 = vpack.c.b16 %v515, %v512
        %v549 = vpack.c.b16 %v516, %v513
        %v550 = vpack.c.b16 %v517, %v514
        %v551 = vpack.c.b16 %v521, %v518
        %v552 = vpack.c.b16 %v522, %v519
        %v553 = vpack.c.b16 %v523, %v520
        %v554 = vpack.c.b16 %v527, %v524
        %v555 = vpack.c.b16 %v528, %v525
        %v556 = vpack.c.b16 %v529, %v526
        %v557 = vpack.c.b16 %v533, %v530
        %v558 = vpack.c.b16 %v534, %v531
        %v559 = vpack.c.b16 %v535, %v532
        %584 = vmatpush.bf16.msra.mxu0 %v557
        %585 = vmatpush.bf16.msra.mxu0 %v554
        %586 = vmatpush.bf16.msra.mxu0 %v551
        %587 = vmatpush.bf16.msra.mxu0 %v548
        %588 = vmatpush.bf16.msra.mxu0 %v545
        %589 = vmatpush.bf16.msra.mxu0 %v542
        %590 = vmatpush.bf16.msra.mxu0 %v539
        %591 = vmatpush.bf16.msra.mxu0 %v536
        %592 = vmatmul.bf16.gmra.mxu0 %v384
        %v593 = vpop.f32.mrf.mxu0
        %v594 = vadd.f32 %v450, %v593
        %v595 = vpop.f32.mrf.mxu0
        %v596 = vadd.f32 %v450, %v595
        %597 = vmatmul.bf16.gmra.mxu0 %v385
        %v598 = vpop.f32.mrf.mxu0
        %v599 = vadd.f32 %v450, %v598
        %v600 = vpop.f32.mrf.mxu0
        %v601 = vadd.f32 %v450, %v600
        %602 = vmatmul.bf16.gmra.mxu0 %v386
        %v603 = vpop.f32.mrf.mxu0
        %v604 = vadd.f32 %v450, %v603
        %v605 = vpop.f32.mrf.mxu0
        %v606 = vadd.f32 %v450, %v605
        %607 = vmatmul.bf16.gmra.mxu0 %v387
        %v608 = vpop.f32.mrf.mxu0
        %v609 = vadd.f32 %v450, %v608
        %v610 = vpop.f32.mrf.mxu0
        %v611 = vadd.f32 %v450, %v610
        %612 = vmatmul.bf16.gmra.mxu0 %v388
        %v613 = vpop.f32.mrf.mxu0
        %v614 = vadd.f32 %v450, %v613
        %v615 = vpop.f32.mrf.mxu0
        %v616 = vadd.f32 %v450, %v615
        %617 = vmatmul.bf16.gmra.mxu0 %v389
        %v618 = vpop.f32.mrf.mxu0
        %v619 = vadd.f32 %v450, %v618
        %v620 = vpop.f32.mrf.mxu0
        %v621 = vadd.f32 %v450, %v620
        %622 = vmatmul.bf16.gmra.mxu0 %v390
        %v623 = vpop.f32.mrf.mxu0
        %v624 = vadd.f32 %v450, %v623
        %v625 = vpop.f32.mrf.mxu0
        %v626 = vadd.f32 %v450, %v625
        %627 = vmatmul.bf16.gmra.mxu0 %v391
        %v628 = vpop.f32.mrf.mxu0
        %v629 = vadd.f32 %v450, %v628
        %v630 = vpop.f32.mrf.mxu0
        %v631 = vadd.f32 %v450, %v630
        %632 = vmatmul.bf16.gmra.mxu0 %v392
        %v633 = vpop.f32.mrf.mxu0
        %v634 = vadd.f32 %v450, %v633
        %v635 = vpop.f32.mrf.mxu0
        %v636 = vadd.f32 %v450, %v635
        %637 = vmatmul.bf16.gmra.mxu0 %v393
        %v638 = vpop.f32.mrf.mxu0
        %v639 = vadd.f32 %v450, %v638
        %v640 = vpop.f32.mrf.mxu0
        %v641 = vadd.f32 %v450, %v640
        %642 = vmatmul.bf16.gmra.mxu0 %v394
        %v643 = vpop.f32.mrf.mxu0
        %v644 = vadd.f32 %v450, %v643
        %v645 = vpop.f32.mrf.mxu0
        %v646 = vadd.f32 %v450, %v645
        %647 = vmatmul.bf16.gmra.mxu0 %v395
        %v648 = vpop.f32.mrf.mxu0
        %v649 = vadd.f32 %v450, %v648
        %v650 = vpop.f32.mrf.mxu0
        %v651 = vadd.f32 %v450, %v650
        %652 = vmatmul.bf16.gmra.mxu0 %v396
        %v653 = vpop.f32.mrf.mxu0
        %v654 = vadd.f32 %v450, %v653
        %v655 = vpop.f32.mrf.mxu0
        %v656 = vadd.f32 %v450, %v655
        %657 = vmatmul.bf16.gmra.mxu0 %v397
        %v658 = vpop.f32.mrf.mxu0
        %v659 = vadd.f32 %v450, %v658
        %v660 = vpop.f32.mrf.mxu0
        %v661 = vadd.f32 %v450, %v660
        %662 = vmatmul.bf16.gmra.mxu0 %v398
        %v663 = vpop.f32.mrf.mxu0
        %v664 = vadd.f32 %v450, %v663
        %v665 = vpop.f32.mrf.mxu0
        %v666 = vadd.f32 %v450, %v665
        %667 = vmatmul.bf16.gmra.mxu0 %v399
        %v668 = vpop.f32.mrf.mxu0
        %v669 = vadd.f32 %v450, %v668
        %v670 = vpop.f32.mrf.mxu0
        %v671 = vadd.f32 %v450, %v670
        %672 = vmatmul.bf16.gmra.mxu0 %v400
        %v673 = vpop.f32.mrf.mxu0
        %v674 = vadd.f32 %v450, %v673
        %v675 = vpop.f32.mrf.mxu0
        %v676 = vadd.f32 %v450, %v675
        %677 = vmatmul.bf16.gmra.mxu0 %v401
        %v678 = vpop.f32.mrf.mxu0
        %v679 = vadd.f32 %v450, %v678
        %v680 = vpop.f32.mrf.mxu0
        %v681 = vadd.f32 %v450, %v680
        %682 = vmatmul.bf16.gmra.mxu0 %v402
        %v683 = vpop.f32.mrf.mxu0
        %v684 = vadd.f32 %v450, %v683
        %v685 = vpop.f32.mrf.mxu0
        %v686 = vadd.f32 %v450, %v685
        %687 = vmatmul.bf16.gmra.mxu0 %v403
        %v688 = vpop.f32.mrf.mxu0
        %v689 = vadd.f32 %v450, %v688
        %v690 = vpop.f32.mrf.mxu0
        %v691 = vadd.f32 %v450, %v690
        %692 = vmatmul.bf16.gmra.mxu0 %v404
        %v693 = vpop.f32.mrf.mxu0
        %v694 = vadd.f32 %v450, %v693
        %v695 = vpop.f32.mrf.mxu0
        %v696 = vadd.f32 %v450, %v695
        %697 = vmatmul.bf16.gmra.mxu0 %v405
        %v698 = vpop.f32.mrf.mxu0
        %v699 = vadd.f32 %v450, %v698
        %v700 = vpop.f32.mrf.mxu0
        %v701 = vadd.f32 %v450, %v700
        %702 = vmatmul.bf16.gmra.mxu0 %v406
        %v703 = vpop.f32.mrf.mxu0
        %v704 = vadd.f32 %v450, %v703
        %v705 = vpop.f32.mrf.mxu0
        %v706 = vadd.f32 %v450, %v705
        %707 = vmatmul.bf16.gmra.mxu0 %v407
        %v708 = vpop.f32.mrf.mxu0
        %v709 = vadd.f32 %v450, %v708
        %v710 = vpop.f32.mrf.mxu0
        %v711 = vadd.f32 %v450, %v710
        %712 = vmatmul.bf16.gmra.mxu0 %v408
        %v713 = vpop.f32.mrf.mxu0
        %v714 = vadd.f32 %v450, %v713
        %v715 = vpop.f32.mrf.mxu0
        %v716 = vadd.f32 %v450, %v715
        %717 = vmatmul.bf16.gmra.mxu0 %v409
        %v718 = vpop.f32.mrf.mxu0
        %v719 = vadd.f32 %v450, %v718
        %v720 = vpop.f32.mrf.mxu0
        %v721 = vadd.f32 %v450, %v720
        %722 = vmatmul.bf16.gmra.mxu0 %v410
        %v723 = vpop.f32.mrf.mxu0
        %v724 = vadd.f32 %v450, %v723
        %v725 = vpop.f32.mrf.mxu0
        %v726 = vadd.f32 %v450, %v725
        %727 = vmatmul.bf16.gmra.mxu0 %v411
        %v728 = vpop.f32.mrf.mxu0
        %v729 = vadd.f32 %v450, %v728
        %v730 = vpop.f32.mrf.mxu0
        %v731 = vadd.f32 %v450, %v730
        %732 = vmatmul.bf16.gmra.mxu0 %v412
        %v733 = vpop.f32.mrf.mxu0
        %v734 = vadd.f32 %v450, %v733
        %v735 = vpop.f32.mrf.mxu0
        %v736 = vadd.f32 %v450, %v735
        %737 = vmatmul.bf16.gmra.mxu0 %v413
        %v738 = vpop.f32.mrf.mxu0
        %v739 = vadd.f32 %v450, %v738
        %v740 = vpop.f32.mrf.mxu0
        %v741 = vadd.f32 %v450, %v740
        %742 = vmatmul.bf16.gmra.mxu0 %v414
        %v743 = vpop.f32.mrf.mxu0
        %v744 = vadd.f32 %v450, %v743
        %v745 = vpop.f32.mrf.mxu0
        %v746 = vadd.f32 %v450, %v745
        %747 = vmatmul.bf16.gmra.mxu0 %v415
        %v748 = vpop.f32.mrf.mxu0
        %v749 = vadd.f32 %v450, %v748
        %v750 = vpop.f32.mrf.mxu0
        %v751 = vadd.f32 %v450, %v750
        %752 = vdwg.mxu0
        %753 = vmatpush.bf16.msra.mxu0 %v558
        %754 = vmatpush.bf16.msra.mxu0 %v555
        %755 = vmatpush.bf16.msra.mxu0 %v552
        %756 = vmatpush.bf16.msra.mxu0 %v549
        %757 = vmatpush.bf16.msra.mxu0 %v546
        %758 = vmatpush.bf16.msra.mxu0 %v543
        %759 = vmatpush.bf16.msra.mxu0 %v540
        %760 = vmatpush.bf16.msra.mxu0 %v537
        %761 = vmatmul.bf16.gmra.mxu0 %v384
        %v762 = vpop.f32.mrf.mxu0
        %v763 = vadd.f32 %v451, %v762
        %v764 = vpop.f32.mrf.mxu0
        %v765 = vadd.f32 %v451, %v764
        %766 = vmatmul.bf16.gmra.mxu0 %v385
        %v767 = vpop.f32.mrf.mxu0
        %v768 = vadd.f32 %v451, %v767
        %v769 = vpop.f32.mrf.mxu0
        %v770 = vadd.f32 %v451, %v769
        %771 = vmatmul.bf16.gmra.mxu0 %v386
        %v772 = vpop.f32.mrf.mxu0
        %v773 = vadd.f32 %v451, %v772
        %v774 = vpop.f32.mrf.mxu0
        %v775 = vadd.f32 %v451, %v774
        %776 = vmatmul.bf16.gmra.mxu0 %v387
        %v777 = vpop.f32.mrf.mxu0
        %v778 = vadd.f32 %v451, %v777
        %v779 = vpop.f32.mrf.mxu0
        %v780 = vadd.f32 %v451, %v779
        %781 = vmatmul.bf16.gmra.mxu0 %v388
        %v782 = vpop.f32.mrf.mxu0
        %v783 = vadd.f32 %v451, %v782
        %v784 = vpop.f32.mrf.mxu0
        %v785 = vadd.f32 %v451, %v784
        %786 = vmatmul.bf16.gmra.mxu0 %v389
        %v787 = vpop.f32.mrf.mxu0
        %v788 = vadd.f32 %v451, %v787
        %v789 = vpop.f32.mrf.mxu0
        %v790 = vadd.f32 %v451, %v789
        %791 = vmatmul.bf16.gmra.mxu0 %v390
        %v792 = vpop.f32.mrf.mxu0
        %v793 = vadd.f32 %v451, %v792
        %v794 = vpop.f32.mrf.mxu0
        %v795 = vadd.f32 %v451, %v794
        %796 = vmatmul.bf16.gmra.mxu0 %v391
        %v797 = vpop.f32.mrf.mxu0
        %v798 = vadd.f32 %v451, %v797
        %v799 = vpop.f32.mrf.mxu0
        %v800 = vadd.f32 %v451, %v799
        %801 = vmatmul.bf16.gmra.mxu0 %v392
        %v802 = vpop.f32.mrf.mxu0
        %v803 = vadd.f32 %v451, %v802
        %v804 = vpop.f32.mrf.mxu0
        %v805 = vadd.f32 %v451, %v804
        %806 = vmatmul.bf16.gmra.mxu0 %v393
        %v807 = vpop.f32.mrf.mxu0
        %v808 = vadd.f32 %v451, %v807
        %v809 = vpop.f32.mrf.mxu0
        %v810 = vadd.f32 %v451, %v809
        %811 = vmatmul.bf16.gmra.mxu0 %v394
        %v812 = vpop.f32.mrf.mxu0
        %v813 = vadd.f32 %v451, %v812
        %v814 = vpop.f32.mrf.mxu0
        %v815 = vadd.f32 %v451, %v814
        %816 = vmatmul.bf16.gmra.mxu0 %v395
        %v817 = vpop.f32.mrf.mxu0
        %v818 = vadd.f32 %v451, %v817
        %v819 = vpop.f32.mrf.mxu0
        %v820 = vadd.f32 %v451, %v819
        %821 = vmatmul.bf16.gmra.mxu0 %v396
        %v822 = vpop.f32.mrf.mxu0
        %v823 = vadd.f32 %v451, %v822
        %v824 = vpop.f32.mrf.mxu0
        %v825 = vadd.f32 %v451, %v824
        %826 = vmatmul.bf16.gmra.mxu0 %v397
        %v827 = vpop.f32.mrf.mxu0
        %v828 = vadd.f32 %v451, %v827
        %v829 = vpop.f32.mrf.mxu0
        %v830 = vadd.f32 %v451, %v829
        %831 = vmatmul.bf16.gmra.mxu0 %v398
        %v832 = vpop.f32.mrf.mxu0
        %v833 = vadd.f32 %v451, %v832
        %v834 = vpop.f32.mrf.mxu0
        %v835 = vadd.f32 %v451, %v834
        %836 = vmatmul.bf16.gmra.mxu0 %v399
        %v837 = vpop.f32.mrf.mxu0
        %v838 = vadd.f32 %v451, %v837
        %v839 = vpop.f32.mrf.mxu0
        %v840 = vadd.f32 %v451, %v839
        %841 = vmatmul.bf16.gmra.mxu0 %v400
        %v842 = vpop.f32.mrf.mxu0
        %v843 = vadd.f32 %v451, %v842
        %v844 = vpop.f32.mrf.mxu0
        %v845 = vadd.f32 %v451, %v844
        %846 = vmatmul.bf16.gmra.mxu0 %v401
        %v847 = vpop.f32.mrf.mxu0
        %v848 = vadd.f32 %v451, %v847
        %v849 = vpop.f32.mrf.mxu0
        %v850 = vadd.f32 %v451, %v849
        %851 = vmatmul.bf16.gmra.mxu0 %v402
        %v852 = vpop.f32.mrf.mxu0
        %v853 = vadd.f32 %v451, %v852
        %v854 = vpop.f32.mrf.mxu0
        %v855 = vadd.f32 %v451, %v854
        %856 = vmatmul.bf16.gmra.mxu0 %v403
        %v857 = vpop.f32.mrf.mxu0
        %v858 = vadd.f32 %v451, %v857
        %v859 = vpop.f32.mrf.mxu0
        %v860 = vadd.f32 %v451, %v859
        %861 = vmatmul.bf16.gmra.mxu0 %v404
        %v862 = vpop.f32.mrf.mxu0
        %v863 = vadd.f32 %v451, %v862
        %v864 = vpop.f32.mrf.mxu0
        %v865 = vadd.f32 %v451, %v864
        %866 = vmatmul.bf16.gmra.mxu0 %v405
        %v867 = vpop.f32.mrf.mxu0
        %v868 = vadd.f32 %v451, %v867
        %v869 = vpop.f32.mrf.mxu0
        %v870 = vadd.f32 %v451, %v869
        %871 = vmatmul.bf16.gmra.mxu0 %v406
        %v872 = vpop.f32.mrf.mxu0
        %v873 = vadd.f32 %v451, %v872
        %v874 = vpop.f32.mrf.mxu0
        %v875 = vadd.f32 %v451, %v874
        %876 = vmatmul.bf16.gmra.mxu0 %v407
        %v877 = vpop.f32.mrf.mxu0
        %v878 = vadd.f32 %v451, %v877
        %v879 = vpop.f32.mrf.mxu0
        %v880 = vadd.f32 %v451, %v879
        %881 = vmatmul.bf16.gmra.mxu0 %v408
        %v882 = vpop.f32.mrf.mxu0
        %v883 = vadd.f32 %v451, %v882
        %v884 = vpop.f32.mrf.mxu0
        %v885 = vadd.f32 %v451, %v884
        %886 = vmatmul.bf16.gmra.mxu0 %v409
        %v887 = vpop.f32.mrf.mxu0
        %v888 = vadd.f32 %v451, %v887
        %v889 = vpop.f32.mrf.mxu0
        %v890 = vadd.f32 %v451, %v889
        %891 = vmatmul.bf16.gmra.mxu0 %v410
        %v892 = vpop.f32.mrf.mxu0
        %v893 = vadd.f32 %v451, %v892
        %v894 = vpop.f32.mrf.mxu0
        %v895 = vadd.f32 %v451, %v894
        %896 = vmatmul.bf16.gmra.mxu0 %v411
        %v897 = vpop.f32.mrf.mxu0
        %v898 = vadd.f32 %v451, %v897
        %v899 = vpop.f32.mrf.mxu0
        %v900 = vadd.f32 %v451, %v899
        %901 = vmatmul.bf16.gmra.mxu0 %v412
        %v902 = vpop.f32.mrf.mxu0
        %v903 = vadd.f32 %v451, %v902
        %v904 = vpop.f32.mrf.mxu0
        %v905 = vadd.f32 %v451, %v904
        %906 = vmatmul.bf16.gmra.mxu0 %v413
        %v907 = vpop.f32.mrf.mxu0
        %v908 = vadd.f32 %v451, %v907
        %v909 = vpop.f32.mrf.mxu0
        %v910 = vadd.f32 %v451, %v909
        %911 = vmatmul.bf16.gmra.mxu0 %v414
        %v912 = vpop.f32.mrf.mxu0
        %v913 = vadd.f32 %v451, %v912
        %v914 = vpop.f32.mrf.mxu0
        %v915 = vadd.f32 %v451, %v914
        %916 = vmatmul.bf16.gmra.mxu0 %v415
        %v917 = vpop.f32.mrf.mxu0
        %v918 = vadd.f32 %v451, %v917
        %v919 = vpop.f32.mrf.mxu0
        %v920 = vadd.f32 %v451, %v919
        %921 = vdwg.mxu0
        %922 = vmatpush.bf16.msra.mxu0 %v559
        %923 = vmatpush.bf16.msra.mxu0 %v556
        %924 = vmatpush.bf16.msra.mxu0 %v553
        %925 = vmatpush.bf16.msra.mxu0 %v550
        %926 = vmatpush.bf16.msra.mxu0 %v547
        %927 = vmatpush.bf16.msra.mxu0 %v544
        %928 = vmatpush.bf16.msra.mxu0 %v541
        %929 = vmatpush.bf16.msra.mxu0 %v538
        %930 = vmatmul.bf16.gmra.mxu0 %v384
        %v931 = vpop.f32.mrf.mxu0
        %v932 = vadd.f32 %v452, %v931
        %v933 = vpop.f32.mrf.mxu0
        %v934 = vadd.f32 %v452, %v933
        %935 = vmatmul.bf16.gmra.mxu0 %v385
        %v936 = vpop.f32.mrf.mxu0
        %v937 = vadd.f32 %v452, %v936
        %v938 = vpop.f32.mrf.mxu0
        %v939 = vadd.f32 %v452, %v938
        %940 = vmatmul.bf16.gmra.mxu0 %v386
        %v941 = vpop.f32.mrf.mxu0
        %v942 = vadd.f32 %v452, %v941
        %v943 = vpop.f32.mrf.mxu0
        %v944 = vadd.f32 %v452, %v943
        %945 = vmatmul.bf16.gmra.mxu0 %v387
        %v946 = vpop.f32.mrf.mxu0
        %v947 = vadd.f32 %v452, %v946
        %v948 = vpop.f32.mrf.mxu0
        %v949 = vadd.f32 %v452, %v948
        %950 = vmatmul.bf16.gmra.mxu0 %v388
        %v951 = vpop.f32.mrf.mxu0
        %v952 = vadd.f32 %v452, %v951
        %v953 = vpop.f32.mrf.mxu0
        %v954 = vadd.f32 %v452, %v953
        %955 = vmatmul.bf16.gmra.mxu0 %v389
        %v956 = vpop.f32.mrf.mxu0
        %v957 = vadd.f32 %v452, %v956
        %v958 = vpop.f32.mrf.mxu0
        %v959 = vadd.f32 %v452, %v958
        %960 = vmatmul.bf16.gmra.mxu0 %v390
        %v961 = vpop.f32.mrf.mxu0
        %v962 = vadd.f32 %v452, %v961
        %v963 = vpop.f32.mrf.mxu0
        %v964 = vadd.f32 %v452, %v963
        %965 = vmatmul.bf16.gmra.mxu0 %v391
        %v966 = vpop.f32.mrf.mxu0
        %v967 = vadd.f32 %v452, %v966
        %v968 = vpop.f32.mrf.mxu0
        %v969 = vadd.f32 %v452, %v968
        %970 = vmatmul.bf16.gmra.mxu0 %v392
        %v971 = vpop.f32.mrf.mxu0
        %v972 = vadd.f32 %v452, %v971
        %v973 = vpop.f32.mrf.mxu0
        %v974 = vadd.f32 %v452, %v973
        %975 = vmatmul.bf16.gmra.mxu0 %v393
        %v976 = vpop.f32.mrf.mxu0
        %v977 = vadd.f32 %v452, %v976
        %v978 = vpop.f32.mrf.mxu0
        %v979 = vadd.f32 %v452, %v978
        %980 = vmatmul.bf16.gmra.mxu0 %v394
        %v981 = vpop.f32.mrf.mxu0
        %v982 = vadd.f32 %v452, %v981
        %v983 = vpop.f32.mrf.mxu0
        %v984 = vadd.f32 %v452, %v983
        %985 = vmatmul.bf16.gmra.mxu0 %v395
        %v986 = vpop.f32.mrf.mxu0
        %v987 = vadd.f32 %v452, %v986
        %v988 = vpop.f32.mrf.mxu0
        %v989 = vadd.f32 %v452, %v988
        %990 = vmatmul.bf16.gmra.mxu0 %v396
        %v991 = vpop.f32.mrf.mxu0
        %v992 = vadd.f32 %v452, %v991
        %v993 = vpop.f32.mrf.mxu0
        %v994 = vadd.f32 %v452, %v993
        %995 = vmatmul.bf16.gmra.mxu0 %v397
        %v996 = vpop.f32.mrf.mxu0
        %v997 = vadd.f32 %v452, %v996
        %v998 = vpop.f32.mrf.mxu0
        %v999 = vadd.f32 %v452, %v998
        %1000 = vmatmul.bf16.gmra.mxu0 %v398
        %v1001 = vpop.f32.mrf.mxu0
        %v1002 = vadd.f32 %v452, %v1001
        %v1003 = vpop.f32.mrf.mxu0
        %v1004 = vadd.f32 %v452, %v1003
        %1005 = vmatmul.bf16.gmra.mxu0 %v399
        %v1006 = vpop.f32.mrf.mxu0
        %v1007 = vadd.f32 %v452, %v1006
        %v1008 = vpop.f32.mrf.mxu0
        %v1009 = vadd.f32 %v452, %v1008
        %1010 = vmatmul.bf16.gmra.mxu0 %v400
        %v1011 = vpop.f32.mrf.mxu0
        %v1012 = vadd.f32 %v452, %v1011
        %v1013 = vpop.f32.mrf.mxu0
        %v1014 = vadd.f32 %v452, %v1013
        %1015 = vmatmul.bf16.gmra.mxu0 %v401
        %v1016 = vpop.f32.mrf.mxu0
        %v1017 = vadd.f32 %v452, %v1016
        %v1018 = vpop.f32.mrf.mxu0
        %v1019 = vadd.f32 %v452, %v1018
        %1020 = vmatmul.bf16.gmra.mxu0 %v402
        %v1021 = vpop.f32.mrf.mxu0
        %v1022 = vadd.f32 %v452, %v1021
        %v1023 = vpop.f32.mrf.mxu0
        %v1024 = vadd.f32 %v452, %v1023
        %1025 = vmatmul.bf16.gmra.mxu0 %v403
        %v1026 = vpop.f32.mrf.mxu0
        %v1027 = vadd.f32 %v452, %v1026
        %v1028 = vpop.f32.mrf.mxu0
        %v1029 = vadd.f32 %v452, %v1028
        %1030 = vmatmul.bf16.gmra.mxu0 %v404
        %v1031 = vpop.f32.mrf.mxu0
        %v1032 = vadd.f32 %v452, %v1031
        %v1033 = vpop.f32.mrf.mxu0
        %v1034 = vadd.f32 %v452, %v1033
        %1035 = vmatmul.bf16.gmra.mxu0 %v405
        %v1036 = vpop.f32.mrf.mxu0
        %v1037 = vadd.f32 %v452, %v1036
        %v1038 = vpop.f32.mrf.mxu0
        %v1039 = vadd.f32 %v452, %v1038
        %1040 = vmatmul.bf16.gmra.mxu0 %v406
        %v1041 = vpop.f32.mrf.mxu0
        %v1042 = vadd.f32 %v452, %v1041
        %v1043 = vpop.f32.mrf.mxu0
        %v1044 = vadd.f32 %v452, %v1043
        %1045 = vmatmul.bf16.gmra.mxu0 %v407
        %v1046 = vpop.f32.mrf.mxu0
        %v1047 = vadd.f32 %v452, %v1046
        %v1048 = vpop.f32.mrf.mxu0
        %v1049 = vadd.f32 %v452, %v1048
        %1050 = vmatmul.bf16.gmra.mxu0 %v408
        %v1051 = vpop.f32.mrf.mxu0
        %v1052 = vadd.f32 %v452, %v1051
        %v1053 = vpop.f32.mrf.mxu0
        %v1054 = vadd.f32 %v452, %v1053
        %1055 = vmatmul.bf16.gmra.mxu0 %v409
        %v1056 = vpop.f32.mrf.mxu0
        %v1057 = vadd.f32 %v452, %v1056
        %v1058 = vpop.f32.mrf.mxu0
        %v1059 = vadd.f32 %v452, %v1058
        %1060 = vmatmul.bf16.gmra.mxu0 %v410
        %v1061 = vpop.f32.mrf.mxu0
        %v1062 = vadd.f32 %v452, %v1061
        %v1063 = vpop.f32.mrf.mxu0
        %v1064 = vadd.f32 %v452, %v1063
        %1065 = vmatmul.bf16.gmra.mxu0 %v411
        %v1066 = vpop.f32.mrf.mxu0
        %v1067 = vadd.f32 %v452, %v1066
        %v1068 = vpop.f32.mrf.mxu0
        %v1069 = vadd.f32 %v452, %v1068
        %1070 = vmatmul.bf16.gmra.mxu0 %v412
        %v1071 = vpop.f32.mrf.mxu0
        %v1072 = vadd.f32 %v452, %v1071
        %v1073 = vpop.f32.mrf.mxu0
        %v1074 = vadd.f32 %v452, %v1073
        %1075 = vmatmul.bf16.gmra.mxu0 %v413
        %v1076 = vpop.f32.mrf.mxu0
        %v1077 = vadd.f32 %v452, %v1076
        %v1078 = vpop.f32.mrf.mxu0
        %v1079 = vadd.f32 %v452, %v1078
        %1080 = vmatmul.bf16.gmra.mxu0 %v414
        %v1081 = vpop.f32.mrf.mxu0
        %v1082 = vadd.f32 %v452, %v1081
        %v1083 = vpop.f32.mrf.mxu0
        %v1084 = vadd.f32 %v452, %v1083
        %1085 = vmatmul.bf16.gmra.mxu0 %v415
        %v1086 = vpop.f32.mrf.mxu0
        %v1087 = vadd.f32 %v452, %v1086
        %v1088 = vpop.f32.mrf.mxu0
        %v1089 = vadd.f32 %v452, %v1088
        %1090 = vdwg.mxu0
        %v1091 = vpack.c.bf16 %v594, %v594
        %v1092 = vpack.c.bf16 %v596, %v596
        %v1093 = vpack.c.bf16 %v599, %v599
        %v1094 = vpack.c.bf16 %v601, %v601
        %v1095 = vpack.c.bf16 %v604, %v604
        %v1096 = vpack.c.bf16 %v606, %v606
        %v1097 = vpack.c.bf16 %v609, %v609
        %v1098 = vpack.c.bf16 %v611, %v611
        %v1099 = vpack.c.bf16 %v614, %v614
        %v1100 = vpack.c.bf16 %v616, %v616
        %v1101 = vpack.c.bf16 %v619, %v619
        %v1102 = vpack.c.bf16 %v621, %v621
        %v1103 = vpack.c.bf16 %v624, %v624
        %v1104 = vpack.c.bf16 %v626, %v626
        %v1105 = vpack.c.bf16 %v629, %v629
        %v1106 = vpack.c.bf16 %v631, %v631
        %v1107 = vpack.c.bf16 %v634, %v634
        %v1108 = vpack.c.bf16 %v636, %v636
        %v1109 = vpack.c.bf16 %v639, %v639
        %v1110 = vpack.c.bf16 %v641, %v641
        %v1111 = vpack.c.bf16 %v644, %v644
        %v1112 = vpack.c.bf16 %v646, %v646
        %v1113 = vpack.c.bf16 %v649, %v649
        %v1114 = vpack.c.bf16 %v651, %v651
        %v1115 = vpack.c.bf16 %v654, %v654
        %v1116 = vpack.c.bf16 %v656, %v656
        %v1117 = vpack.c.bf16 %v659, %v659
        %v1118 = vpack.c.bf16 %v661, %v661
        %v1119 = vpack.c.bf16 %v664, %v664
        %v1120 = vpack.c.bf16 %v666, %v666
        %v1121 = vpack.c.bf16 %v669, %v669
        %v1122 = vpack.c.bf16 %v671, %v671
        %v1123 = vpack.c.bf16 %v674, %v674
        %v1124 = vpack.c.bf16 %v676, %v676
        %v1125 = vpack.c.bf16 %v679, %v679
        %v1126 = vpack.c.bf16 %v681, %v681
        %v1127 = vpack.c.bf16 %v684, %v684
        %v1128 = vpack.c.bf16 %v686, %v686
        %v1129 = vpack.c.bf16 %v689, %v689
        %v1130 = vpack.c.bf16 %v691, %v691
        %v1131 = vpack.c.bf16 %v694, %v694
        %v1132 = vpack.c.bf16 %v696, %v696
        %v1133 = vpack.c.bf16 %v699, %v699
        %v1134 = vpack.c.bf16 %v701, %v701
        %v1135 = vpack.c.bf16 %v704, %v704
        %v1136 = vpack.c.bf16 %v706, %v706
        %v1137 = vpack.c.bf16 %v709, %v709
        %v1138 = vpack.c.bf16 %v711, %v711
        %v1139 = vpack.c.bf16 %v714, %v714
        %v1140 = vpack.c.bf16 %v716, %v716
        %v1141 = vpack.c.bf16 %v719, %v719
        %v1142 = vpack.c.bf16 %v721, %v721
        %v1143 = vpack.c.bf16 %v724, %v724
        %v1144 = vpack.c.bf16 %v726, %v726
        %v1145 = vpack.c.bf16 %v729, %v729
        %v1146 = vpack.c.bf16 %v731, %v731
        %v1147 = vpack.c.bf16 %v734, %v734
        %v1148 = vpack.c.bf16 %v736, %v736
        %v1149 = vpack.c.bf16 %v739, %v739
        %v1150 = vpack.c.bf16 %v741, %v741
        %v1151 = vpack.c.bf16 %v744, %v744
        %v1152 = vpack.c.bf16 %v746, %v746
        %v1153 = vpack.c.bf16 %v749, %v749
        %v1154 = vpack.c.bf16 %v751, %v751
        %1155 = vst [vmem:[%s301] sm:$0xf] %v1091
        %1156 = vst [vmem:[%s301 + $0x4] sm:$0xf] %v1092
        %1157 = vst [vmem:[%s301 + $0x8] sm:$0xf] %v1093
        %1158 = vst [vmem:[%s301 + $0xc] sm:$0xf] %v1094
        %1159 = vst [vmem:[%s301 + $0x10] sm:$0xf] %v1095
        %1160 = vst [vmem:[%s301 + $0x14] sm:$0xf] %v1096
        %1161 = vst [vmem:[%s301 + $0x18] sm:$0xf] %v1097
        %1162 = vst [vmem:[%s301 + $0x1c] sm:$0xf] %v1098
        %1163 = vst [vmem:[%s301 + $0x20] sm:$0xf] %v1099
        %1164 = vst [vmem:[%s301 + $0x24] sm:$0xf] %v1100
        %1165 = vst [vmem:[%s301 + $0x28] sm:$0xf] %v1101
        %1166 = vst [vmem:[%s301 + $0x2c] sm:$0xf] %v1102
        %1167 = vst [vmem:[%s301 + $0x30] sm:$0xf] %v1103
        %1168 = vst [vmem:[%s301 + $0x34] sm:$0xf] %v1104
        %1169 = vst [vmem:[%s301 + $0x38] sm:$0xf] %v1105
        %1170 = vst [vmem:[%s301 + $0x3c] sm:$0xf] %v1106
        %1171 = vst [vmem:[%s301 + $0x40] sm:$0xf] %v1107
        %1172 = vst [vmem:[%s301 + $0x44] sm:$0xf] %v1108
        %1173 = vst [vmem:[%s301 + $0x48] sm:$0xf] %v1109
        %1174 = vst [vmem:[%s301 + $0x4c] sm:$0xf] %v1110
        %1175 = vst [vmem:[%s301 + $0x50] sm:$0xf] %v1111
        %1176 = vst [vmem:[%s301 + $0x54] sm:$0xf] %v1112
        %1177 = vst [vmem:[%s301 + $0x58] sm:$0xf] %v1113
        %1178 = vst [vmem:[%s301 + $0x5c] sm:$0xf] %v1114
        %1179 = vst [vmem:[%s301 + $0x60] sm:$0xf] %v1115
        %1180 = vst [vmem:[%s301 + $0x64] sm:$0xf] %v1116
        %1181 = vst [vmem:[%s301 + $0x68] sm:$0xf] %v1117
        %1182 = vst [vmem:[%s301 + $0x6c] sm:$0xf] %v1118
        %1183 = vst [vmem:[%s301 + $0x70] sm:$0xf] %v1119
        %1184 = vst [vmem:[%s301 + $0x74] sm:$0xf] %v1120
        %1185 = vst [vmem:[%s301 + $0x78] sm:$0xf] %v1121
        %1186 = vst [vmem:[%s301 + $0x7c] sm:$0xf] %v1122
        %1187 = vst [vmem:[%s301 + $0x80] sm:$0xf] %v1123
        %1188 = vst [vmem:[%s301 + $0x84] sm:$0xf] %v1124
        %1189 = vst [vmem:[%s301 + $0x88] sm:$0xf] %v1125
        %1190 = vst [vmem:[%s301 + $0x8c] sm:$0xf] %v1126
        %1191 = vst [vmem:[%s301 + $0x90] sm:$0xf] %v1127
        %1192 = vst [vmem:[%s301 + $0x94] sm:$0xf] %v1128
        %1193 = vst [vmem:[%s301 + $0x98] sm:$0xf] %v1129
        %1194 = vst [vmem:[%s301 + $0x9c] sm:$0xf] %v1130
        %1195 = vst [vmem:[%s301 + $0xa0] sm:$0xf] %v1131
        %1196 = vst [vmem:[%s301 + $0xa4] sm:$0xf] %v1132
        %1197 = vst [vmem:[%s301 + $0xa8] sm:$0xf] %v1133
        %1198 = vst [vmem:[%s301 + $0xac] sm:$0xf] %v1134
        %1199 = vst [vmem:[%s301 + $0xb0] sm:$0xf] %v1135
        %1200 = vst [vmem:[%s301 + $0xb4] sm:$0xf] %v1136
        %1201 = vst [vmem:[%s301 + $0xb8] sm:$0xf] %v1137
        %1202 = vst [vmem:[%s301 + $0xbc] sm:$0xf] %v1138
        %1203 = vst [vmem:[%s301 + $0xc0] sm:$0xf] %v1139
        %1204 = vst [vmem:[%s301 + $0xc4] sm:$0xf] %v1140
        %1205 = vst [vmem:[%s301 + $0xc8] sm:$0xf] %v1141
        %1206 = vst [vmem:[%s301 + $0xcc] sm:$0xf] %v1142
        %1207 = vst [vmem:[%s301 + $0xd0] sm:$0xf] %v1143
        %1208 = vst [vmem:[%s301 + $0xd4] sm:$0xf] %v1144
        %1209 = vst [vmem:[%s301 + $0xd8] sm:$0xf] %v1145
        %1210 = vst [vmem:[%s301 + $0xdc] sm:$0xf] %v1146
        %1211 = vst [vmem:[%s301 + $0xe0] sm:$0xf] %v1147
        %1212 = vst [vmem:[%s301 + $0xe4] sm:$0xf] %v1148
        %1213 = vst [vmem:[%s301 + $0xe8] sm:$0xf] %v1149
        %1214 = vst [vmem:[%s301 + $0xec] sm:$0xf] %v1150
        %1215 = vst [vmem:[%s301 + $0xf0] sm:$0xf] %v1151
        %1216 = vst [vmem:[%s301 + $0xf4] sm:$0xf] %v1152
        %1217 = vst [vmem:[%s301 + $0xf8] sm:$0xf] %v1153
        %1218 = vst [vmem:[%s301 + $0xfc] sm:$0xf] %v1154
        %v1219 = vpack.c.bf16 %v763, %v763
        %v1220 = vpack.c.bf16 %v765, %v765
        %v1221 = vpack.c.bf16 %v768, %v768
        %v1222 = vpack.c.bf16 %v770, %v770
        %v1223 = vpack.c.bf16 %v773, %v773
        %v1224 = vpack.c.bf16 %v775, %v775
        %v1225 = vpack.c.bf16 %v778, %v778
        %v1226 = vpack.c.bf16 %v780, %v780
        %v1227 = vpack.c.bf16 %v783, %v783
        %v1228 = vpack.c.bf16 %v785, %v785
        %v1229 = vpack.c.bf16 %v788, %v788
        %v1230 = vpack.c.bf16 %v790, %v790
        %v1231 = vpack.c.bf16 %v793, %v793
        %v1232 = vpack.c.bf16 %v795, %v795
        %v1233 = vpack.c.bf16 %v798, %v798
        %v1234 = vpack.c.bf16 %v800, %v800
        %v1235 = vpack.c.bf16 %v803, %v803
        %v1236 = vpack.c.bf16 %v805, %v805
        %v1237 = vpack.c.bf16 %v808, %v808
        %v1238 = vpack.c.bf16 %v810, %v810
        %v1239 = vpack.c.bf16 %v813, %v813
        %v1240 = vpack.c.bf16 %v815, %v815
        %v1241 = vpack.c.bf16 %v818, %v818
        %v1242 = vpack.c.bf16 %v820, %v820
        %v1243 = vpack.c.bf16 %v823, %v823
        %v1244 = vpack.c.bf16 %v825, %v825
        %v1245 = vpack.c.bf16 %v828, %v828
        %v1246 = vpack.c.bf16 %v830, %v830
        %v1247 = vpack.c.bf16 %v833, %v833
        %v1248 = vpack.c.bf16 %v835, %v835
        %v1249 = vpack.c.bf16 %v838, %v838
        %v1250 = vpack.c.bf16 %v840, %v840
        %v1251 = vpack.c.bf16 %v843, %v843
        %v1252 = vpack.c.bf16 %v845, %v845
        %v1253 = vpack.c.bf16 %v848, %v848
        %v1254 = vpack.c.bf16 %v850, %v850
        %v1255 = vpack.c.bf16 %v853, %v853
        %v1256 = vpack.c.bf16 %v855, %v855
        %v1257 = vpack.c.bf16 %v858, %v858
        %v1258 = vpack.c.bf16 %v860, %v860
        %v1259 = vpack.c.bf16 %v863, %v863
        %v1260 = vpack.c.bf16 %v865, %v865
        %v1261 = vpack.c.bf16 %v868, %v868
        %v1262 = vpack.c.bf16 %v870, %v870
        %v1263 = vpack.c.bf16 %v873, %v873
        %v1264 = vpack.c.bf16 %v875, %v875
        %v1265 = vpack.c.bf16 %v878, %v878
        %v1266 = vpack.c.bf16 %v880, %v880
        %v1267 = vpack.c.bf16 %v883, %v883
        %v1268 = vpack.c.bf16 %v885, %v885
        %v1269 = vpack.c.bf16 %v888, %v888
        %v1270 = vpack.c.bf16 %v890, %v890
        %v1271 = vpack.c.bf16 %v893, %v893
        %v1272 = vpack.c.bf16 %v895, %v895
        %v1273 = vpack.c.bf16 %v898, %v898
        %v1274 = vpack.c.bf16 %v900, %v900
        %v1275 = vpack.c.bf16 %v903, %v903
        %v1276 = vpack.c.bf16 %v905, %v905
        %v1277 = vpack.c.bf16 %v908, %v908
        %v1278 = vpack.c.bf16 %v910, %v910
        %v1279 = vpack.c.bf16 %v913, %v913
        %v1280 = vpack.c.bf16 %v915, %v915
        %v1281 = vpack.c.bf16 %v918, %v918
        %v1282 = vpack.c.bf16 %v920, %v920
        %1283 = vst [vmem:[%s308] sm:$0xf] %v1219
        %1284 = vst [vmem:[%s308 + $0x4] sm:$0xf] %v1220
        %1285 = vst [vmem:[%s308 + $0x8] sm:$0xf] %v1221
        %1286 = vst [vmem:[%s308 + $0xc] sm:$0xf] %v1222
        %1287 = vst [vmem:[%s308 + $0x10] sm:$0xf] %v1223
        %1288 = vst [vmem:[%s308 + $0x14] sm:$0xf] %v1224
        %1289 = vst [vmem:[%s308 + $0x18] sm:$0xf] %v1225
        %1290 = vst [vmem:[%s308 + $0x1c] sm:$0xf] %v1226
        %1291 = vst [vmem:[%s308 + $0x20] sm:$0xf] %v1227
        %1292 = vst [vmem:[%s308 + $0x24] sm:$0xf] %v1228
        %1293 = vst [vmem:[%s308 + $0x28] sm:$0xf] %v1229
        %1294 = vst [vmem:[%s308 + $0x2c] sm:$0xf] %v1230
        %1295 = vst [vmem:[%s308 + $0x30] sm:$0xf] %v1231
        %1296 = vst [vmem:[%s308 + $0x34] sm:$0xf] %v1232
        %1297 = vst [vmem:[%s308 + $0x38] sm:$0xf] %v1233
        %1298 = vst [vmem:[%s308 + $0x3c] sm:$0xf] %v1234
        %1299 = vst [vmem:[%s308 + $0x40] sm:$0xf] %v1235
        %1300 = vst [vmem:[%s308 + $0x44] sm:$0xf] %v1236
        %1301 = vst [vmem:[%s308 + $0x48] sm:$0xf] %v1237
        %1302 = vst [vmem:[%s308 + $0x4c] sm:$0xf] %v1238
        %1303 = vst [vmem:[%s308 + $0x50] sm:$0xf] %v1239
        %1304 = vst [vmem:[%s308 + $0x54] sm:$0xf] %v1240
        %1305 = vst [vmem:[%s308 + $0x58] sm:$0xf] %v1241
        %1306 = vst [vmem:[%s308 + $0x5c] sm:$0xf] %v1242
        %1307 = vst [vmem:[%s308 + $0x60] sm:$0xf] %v1243
        %1308 = vst [vmem:[%s308 + $0x64] sm:$0xf] %v1244
        %1309 = vst [vmem:[%s308 + $0x68] sm:$0xf] %v1245
        %1310 = vst [vmem:[%s308 + $0x6c] sm:$0xf] %v1246
        %1311 = vst [vmem:[%s308 + $0x70] sm:$0xf] %v1247
        %1312 = vst [vmem:[%s308 + $0x74] sm:$0xf] %v1248
        %1313 = vst [vmem:[%s308 + $0x78] sm:$0xf] %v1249
        %1314 = vst [vmem:[%s308 + $0x7c] sm:$0xf] %v1250
        %1315 = vst [vmem:[%s308 + $0x80] sm:$0xf] %v1251
        %1316 = vst [vmem:[%s308 + $0x84] sm:$0xf] %v1252
        %1317 = vst [vmem:[%s308 + $0x88] sm:$0xf] %v1253
        %1318 = vst [vmem:[%s308 + $0x8c] sm:$0xf] %v1254
        %1319 = vst [vmem:[%s308 + $0x90] sm:$0xf] %v1255
        %1320 = vst [vmem:[%s308 + $0x94] sm:$0xf] %v1256
        %1321 = vst [vmem:[%s308 + $0x98] sm:$0xf] %v1257
        %1322 = vst [vmem:[%s308 + $0x9c] sm:$0xf] %v1258
        %1323 = vst [vmem:[%s308 + $0xa0] sm:$0xf] %v1259
        %1324 = vst [vmem:[%s308 + $0xa4] sm:$0xf] %v1260
        %1325 = vst [vmem:[%s308 + $0xa8] sm:$0xf] %v1261
        %1326 = vst [vmem:[%s308 + $0xac] sm:$0xf] %v1262
        %1327 = vst [vmem:[%s308 + $0xb0] sm:$0xf] %v1263
        %1328 = vst [vmem:[%s308 + $0xb4] sm:$0xf] %v1264
        %1329 = vst [vmem:[%s308 + $0xb8] sm:$0xf] %v1265
        %1330 = vst [vmem:[%s308 + $0xbc] sm:$0xf] %v1266
        %1331 = vst [vmem:[%s308 + $0xc0] sm:$0xf] %v1267
        %1332 = vst [vmem:[%s308 + $0xc4] sm:$0xf] %v1268
        %1333 = vst [vmem:[%s308 + $0xc8] sm:$0xf] %v1269
        %1334 = vst [vmem:[%s308 + $0xcc] sm:$0xf] %v1270
        %1335 = vst [vmem:[%s308 + $0xd0] sm:$0xf] %v1271
        %1336 = vst [vmem:[%s308 + $0xd4] sm:$0xf] %v1272
        %1337 = vst [vmem:[%s308 + $0xd8] sm:$0xf] %v1273
        %1338 = vst [vmem:[%s308 + $0xdc] sm:$0xf] %v1274
        %1339 = vst [vmem:[%s308 + $0xe0] sm:$0xf] %v1275
        %1340 = vst [vmem:[%s308 + $0xe4] sm:$0xf] %v1276
        %1341 = vst [vmem:[%s308 + $0xe8] sm:$0xf] %v1277
        %1342 = vst [vmem:[%s308 + $0xec] sm:$0xf] %v1278
        %1343 = vst [vmem:[%s308 + $0xf0] sm:$0xf] %v1279
        %1344 = vst [vmem:[%s308 + $0xf4] sm:$0xf] %v1280
        %1345 = vst [vmem:[%s308 + $0xf8] sm:$0xf] %v1281
        %1346 = vst [vmem:[%s308 + $0xfc] sm:$0xf] %v1282
        %v1347 = vpack.c.bf16 %v932, %v932
        %v1348 = vpack.c.bf16 %v934, %v934
        %v1349 = vpack.c.bf16 %v937, %v937
        %v1350 = vpack.c.bf16 %v939, %v939
        %v1351 = vpack.c.bf16 %v942, %v942
        %v1352 = vpack.c.bf16 %v944, %v944
        %v1353 = vpack.c.bf16 %v947, %v947
        %v1354 = vpack.c.bf16 %v949, %v949
        %v1355 = vpack.c.bf16 %v952, %v952
        %v1356 = vpack.c.bf16 %v954, %v954
        %v1357 = vpack.c.bf16 %v957, %v957
        %v1358 = vpack.c.bf16 %v959, %v959
        %v1359 = vpack.c.bf16 %v962, %v962
        %v1360 = vpack.c.bf16 %v964, %v964
        %v1361 = vpack.c.bf16 %v967, %v967
        %v1362 = vpack.c.bf16 %v969, %v969
        %v1363 = vpack.c.bf16 %v972, %v972
        %v1364 = vpack.c.bf16 %v974, %v974
        %v1365 = vpack.c.bf16 %v977, %v977
        %v1366 = vpack.c.bf16 %v979, %v979
        %v1367 = vpack.c.bf16 %v982, %v982
        %v1368 = vpack.c.bf16 %v984, %v984
        %v1369 = vpack.c.bf16 %v987, %v987
        %v1370 = vpack.c.bf16 %v989, %v989
        %v1371 = vpack.c.bf16 %v992, %v992
        %v1372 = vpack.c.bf16 %v994, %v994
        %v1373 = vpack.c.bf16 %v997, %v997
        %v1374 = vpack.c.bf16 %v999, %v999
        %v1375 = vpack.c.bf16 %v1002, %v1002
        %v1376 = vpack.c.bf16 %v1004, %v1004
        %v1377 = vpack.c.bf16 %v1007, %v1007
        %v1378 = vpack.c.bf16 %v1009, %v1009
        %v1379 = vpack.c.bf16 %v1012, %v1012
        %v1380 = vpack.c.bf16 %v1014, %v1014
        %v1381 = vpack.c.bf16 %v1017, %v1017
        %v1382 = vpack.c.bf16 %v1019, %v1019
        %v1383 = vpack.c.bf16 %v1022, %v1022
        %v1384 = vpack.c.bf16 %v1024, %v1024
        %v1385 = vpack.c.bf16 %v1027, %v1027
        %v1386 = vpack.c.bf16 %v1029, %v1029
        %v1387 = vpack.c.bf16 %v1032, %v1032
        %v1388 = vpack.c.bf16 %v1034, %v1034
        %v1389 = vpack.c.bf16 %v1037, %v1037
        %v1390 = vpack.c.bf16 %v1039, %v1039
        %v1391 = vpack.c.bf16 %v1042, %v1042
        %v1392 = vpack.c.bf16 %v1044, %v1044
        %v1393 = vpack.c.bf16 %v1047, %v1047
        %v1394 = vpack.c.bf16 %v1049, %v1049
        %v1395 = vpack.c.bf16 %v1052, %v1052
        %v1396 = vpack.c.bf16 %v1054, %v1054
        %v1397 = vpack.c.bf16 %v1057, %v1057
        %v1398 = vpack.c.bf16 %v1059, %v1059
        %v1399 = vpack.c.bf16 %v1062, %v1062
        %v1400 = vpack.c.bf16 %v1064, %v1064
        %v1401 = vpack.c.bf16 %v1067, %v1067
        %v1402 = vpack.c.bf16 %v1069, %v1069
        %v1403 = vpack.c.bf16 %v1072, %v1072
        %v1404 = vpack.c.bf16 %v1074, %v1074
        %v1405 = vpack.c.bf16 %v1077, %v1077
        %v1406 = vpack.c.bf16 %v1079, %v1079
        %v1407 = vpack.c.bf16 %v1082, %v1082
        %v1408 = vpack.c.bf16 %v1084, %v1084
        %v1409 = vpack.c.bf16 %v1087, %v1087
        %v1410 = vpack.c.bf16 %v1089, %v1089
        %1411 = vst [vmem:[%s315] sm:$0xf] %v1347
        %1412 = vst [vmem:[%s315 + $0x4] sm:$0xf] %v1348
        %1413 = vst [vmem:[%s315 + $0x8] sm:$0xf] %v1349
        %1414 = vst [vmem:[%s315 + $0xc] sm:$0xf] %v1350
        %1415 = vst [vmem:[%s315 + $0x10] sm:$0xf] %v1351
        %1416 = vst [vmem:[%s315 + $0x14] sm:$0xf] %v1352
        %1417 = vst [vmem:[%s315 + $0x18] sm:$0xf] %v1353
        %1418 = vst [vmem:[%s315 + $0x1c] sm:$0xf] %v1354
        %1419 = vst [vmem:[%s315 + $0x20] sm:$0xf] %v1355
        %1420 = vst [vmem:[%s315 + $0x24] sm:$0xf] %v1356
        %1421 = vst [vmem:[%s315 + $0x28] sm:$0xf] %v1357
        %1422 = vst [vmem:[%s315 + $0x2c] sm:$0xf] %v1358
        %1423 = vst [vmem:[%s315 + $0x30] sm:$0xf] %v1359
        %1424 = vst [vmem:[%s315 + $0x34] sm:$0xf] %v1360
        %1425 = vst [vmem:[%s315 + $0x38] sm:$0xf] %v1361
        %1426 = vst [vmem:[%s315 + $0x3c] sm:$0xf] %v1362
        %1427 = vst [vmem:[%s315 + $0x40] sm:$0xf] %v1363
        %1428 = vst [vmem:[%s315 + $0x44] sm:$0xf] %v1364
        %1429 = vst [vmem:[%s315 + $0x48] sm:$0xf] %v1365
        %1430 = vst [vmem:[%s315 + $0x4c] sm:$0xf] %v1366
        %1431 = vst [vmem:[%s315 + $0x50] sm:$0xf] %v1367
        %1432 = vst [vmem:[%s315 + $0x54] sm:$0xf] %v1368
        %1433 = vst [vmem:[%s315 + $0x58] sm:$0xf] %v1369
        %1434 = vst [vmem:[%s315 + $0x5c] sm:$0xf] %v1370
        %1435 = vst [vmem:[%s315 + $0x60] sm:$0xf] %v1371
        %1436 = vst [vmem:[%s315 + $0x64] sm:$0xf] %v1372
        %1437 = vst [vmem:[%s315 + $0x68] sm:$0xf] %v1373
        %1438 = vst [vmem:[%s315 + $0x6c] sm:$0xf] %v1374
        %1439 = vst [vmem:[%s315 + $0x70] sm:$0xf] %v1375
        %1440 = vst [vmem:[%s315 + $0x74] sm:$0xf] %v1376
        %1441 = vst [vmem:[%s315 + $0x78] sm:$0xf] %v1377
        %1442 = vst [vmem:[%s315 + $0x7c] sm:$0xf] %v1378
        %1443 = vst [vmem:[%s315 + $0x80] sm:$0xf] %v1379
        %1444 = vst [vmem:[%s315 + $0x84] sm:$0xf] %v1380
        %1445 = vst [vmem:[%s315 + $0x88] sm:$0xf] %v1381
        %1446 = vst [vmem:[%s315 + $0x8c] sm:$0xf] %v1382
        %1447 = vst [vmem:[%s315 + $0x90] sm:$0xf] %v1383
        %1448 = vst [vmem:[%s315 + $0x94] sm:$0xf] %v1384
        %1449 = vst [vmem:[%s315 + $0x98] sm:$0xf] %v1385
        %1450 = vst [vmem:[%s315 + $0x9c] sm:$0xf] %v1386
        %1451 = vst [vmem:[%s315 + $0xa0] sm:$0xf] %v1387
        %1452 = vst [vmem:[%s315 + $0xa4] sm:$0xf] %v1388
        %1453 = vst [vmem:[%s315 + $0xa8] sm:$0xf] %v1389
        %1454 = vst [vmem:[%s315 + $0xac] sm:$0xf] %v1390
        %1455 = vst [vmem:[%s315 + $0xb0] sm:$0xf] %v1391
        %1456 = vst [vmem:[%s315 + $0xb4] sm:$0xf] %v1392
        %1457 = vst [vmem:[%s315 + $0xb8] sm:$0xf] %v1393
        %1458 = vst [vmem:[%s315 + $0xbc] sm:$0xf] %v1394
        %1459 = vst [vmem:[%s315 + $0xc0] sm:$0xf] %v1395
        %1460 = vst [vmem:[%s315 + $0xc4] sm:$0xf] %v1396
        %1461 = vst [vmem:[%s315 + $0xc8] sm:$0xf] %v1397
        %1462 = vst [vmem:[%s315 + $0xcc] sm:$0xf] %v1398
        %1463 = vst [vmem:[%s315 + $0xd0] sm:$0xf] %v1399
        %1464 = vst [vmem:[%s315 + $0xd4] sm:$0xf] %v1400
        %1465 = vst [vmem:[%s315 + $0xd8] sm:$0xf] %v1401
        %1466 = vst [vmem:[%s315 + $0xdc] sm:$0xf] %v1402
        %1467 = vst [vmem:[%s315 + $0xe0] sm:$0xf] %v1403
        %1468 = vst [vmem:[%s315 + $0xe4] sm:$0xf] %v1404
        %1469 = vst [vmem:[%s315 + $0xe8] sm:$0xf] %v1405
        %1470 = vst [vmem:[%s315 + $0xec] sm:$0xf] %v1406
        %1471 = vst [vmem:[%s315 + $0xf0] sm:$0xf] %v1407
        %1472 = vst [vmem:[%s315 + $0xf4] sm:$0xf] %v1408
        %1473 = vst [vmem:[%s315 + $0xf8] sm:$0xf] %v1409
        %1474 = vst [vmem:[%s315 + $0xfc] sm:$0xf] %v1410
        %s1475 = sand.u32 %s119, 1
        %s1476 = scalar_lea.sflag [#allocation4], %s1475
        %s1477 = sand.u32 %s119, 1
        %s1478 = smul.addr %s1477, 256
        %s1479 = scalar_lea.vmem [#allocation8], %s1478
        %s1480 = sand.u32 %s27, 1
        %s1481 = scalar_lea.sflag [#allocation10], %s1480
        %s1482 = sand.u32 %s147, 1
        %s1483 = smul.addr %s1482, 256
        %s1484 = scalar_lea.vmem [#allocation9], %s1483
        %s1485 = sand.u32 %s27, 1
        %s1486 = scalar_lea.sflag [#allocation10], %s1485
        %s1487 = sand.u32 %s175, 1
        %s1488 = smul.addr %s1487, 256
        %s1489 = scalar_lea.vmem [#allocation11], %s1488
        // Predicated region
        $region45: #{tpu_custom_call.1} parent=31 // pred_check
          %p1490 = pneg %p129
        $region46: #{tpu_custom_call.1} parent=31 // pred_check_branch
          %1492 = sbr.rel (%p1490) target = $region48
        $region47: #{tpu_custom_call.1} parent=31 // pred_region
          %s1493 = smul.u32 64, %s32
          %1495 = vsyncadd %s1476, 0
          %s1496 = smul.addr %s31, 64
          %s1497 = sadd.s32 %s1493, %s1496
          %s1498 = smul.addr %s1497, 4
          %s1499 = scalar_lea.hbm %s3, %s1498
          %s1500 = sshll.u32 %s1479, 4
          %s1501 = int_to_ptr.vmem [resolvable:$true] %s1500
          %s1502 = sshll.u32 %s1499, 4
          %s1503 = int_to_ptr.hbm [resolvable:$true] %s1502
          %1508 = dma.vmem_to_hbm [thread:$0]  %s1501, 4096, %s1503, %s1476, 64, 64, 4
        $region48: #{tpu_custom_call.1} parent=31 // pred_fallthru
          _
        // Predicated region
        $region49: #{tpu_custom_call.1} parent=31 // pred_check
          %p1509 = pneg %p157
        $region50: #{tpu_custom_call.1} parent=31 // pred_check_branch
          %1511 = sbr.rel (%p1509) target = $region52
        $region51: #{tpu_custom_call.1} parent=31 // pred_region
          %s1512 = smul.u32 64, %s32
          %1514 = vsyncadd %s1481, 0
          %s1515 = smul.addr %s31, 64
          %s1516 = sadd.s32 %s1512, %s1515
          %s1517 = smul.addr %s1516, 4
          %s1518 = scalar_lea.hbm %s4, %s1517
          %s1519 = sshll.u32 %s1484, 4
          %s1520 = int_to_ptr.vmem [resolvable:$true] %s1519
          %s1521 = sshll.u32 %s1518, 4
          %s1522 = int_to_ptr.hbm [resolvable:$true] %s1521
          %1527 = dma.vmem_to_hbm [thread:$0]  %s1520, 4096, %s1522, %s1481, 64, 64, 4
        $region52: #{tpu_custom_call.1} parent=31 // pred_fallthru
          _
        // Predicated region
        $region53: #{tpu_custom_call.1} parent=31 // pred_check
          %p1528 = pneg %p185
        $region54: #{tpu_custom_call.1} parent=31 // pred_check_branch
          %1530 = sbr.rel (%p1528) target = $region56
        $region55: #{tpu_custom_call.1} parent=31 // pred_region
          %s1531 = smul.u32 64, %s32
          %1533 = vsyncadd %s1486, 0
          %s1534 = smul.addr %s31, 64
          %s1535 = sadd.s32 %s1531, %s1534
          %s1536 = smul.addr %s1535, 4
          %s1537 = scalar_lea.hbm %s5, %s1536
          %s1538 = sshll.u32 %s1489, 4
          %s1539 = int_to_ptr.vmem [resolvable:$true] %s1538
          %s1540 = sshll.u32 %s1537, 4
          %s1541 = int_to_ptr.hbm [resolvable:$true] %s1540
          %1546 = dma.vmem_to_hbm [thread:$0]  %s1539, 4096, %s1541, %s1486, 64, 64, 4
        $region56: #{tpu_custom_call.1} parent=31 // pred_fallthru
          _
      $region32: #{tpu_custom_call.1} parent=5 // pred_fallthru
        _
      %p1547 = scmp.le.s32.totalorder 2, %s22
      // Predicated region
      $region57: #{tpu_custom_call.1} parent=5 // pred_check
        %p1548 = pneg %p1547
      $region58: #{tpu_custom_call.1} parent=5 // pred_check_branch
        %1550 = sbr.rel (%p1548) target = $region60
      $region59: #{tpu_custom_call.1} parent=5 // pred_region
        %s1551 = ssub.s32 %s22, 2
        // Predicated region
        $region61: #{tpu_custom_call.1} parent=59 // pred_check
          %p1552 = pneg %p135
        $region62: #{tpu_custom_call.1} parent=59 // pred_check_branch
          %1554 = sbr.rel (%p1552) target = $region64
        $region63: #{tpu_custom_call.1} parent=59 // pred_region
          %s1555 = sand.u32 %s120, 1
          %s1556 = scalar_lea.sflag [#allocation4], %s1555
          %s1557 = sand.u32 %s120, 1
          %s1558 = smul.addr %s1557, 256
          %s1559 = scalar_lea.vmem [#allocation8], %s1558
          %1561 = dma.done %s1556, 4096
        $region64: #{tpu_custom_call.1} parent=59 // pred_fallthru
          _
        // Predicated region
        $region65: #{tpu_custom_call.1} parent=59 // pred_check
          %p1562 = pneg %p163
        $region66: #{tpu_custom_call.1} parent=59 // pred_check_branch
          %1564 = sbr.rel (%p1562) target = $region68
        $region67: #{tpu_custom_call.1} parent=59 // pred_region
          %s1565 = sand.u32 %s28, 1
          %s1566 = scalar_lea.sflag [#allocation10], %s1565
          %s1567 = sand.u32 %s148, 1
          %s1568 = smul.addr %s1567, 256
          %s1569 = scalar_lea.vmem [#allocation9], %s1568
          %1571 = dma.done %s1566, 4096
        $region68: #{tpu_custom_call.1} parent=59 // pred_fallthru
          _
        // Predicated region
        $region69: #{tpu_custom_call.1} parent=59 // pred_check
          %p1572 = pneg %p191
        $region70: #{tpu_custom_call.1} parent=59 // pred_check_branch
          %1574 = sbr.rel (%p1572) target = $region72
        $region71: #{tpu_custom_call.1} parent=59 // pred_region
          %s1575 = sand.u32 %s28, 1
          %s1576 = scalar_lea.sflag [#allocation10], %s1575
          %s1577 = sand.u32 %s176, 1
          %s1578 = smul.addr %s1577, 256
          %s1579 = scalar_lea.vmem [#allocation11], %s1578
          %1581 = dma.done %s1576, 4096
        $region72: #{tpu_custom_call.1} parent=59 // pred_fallthru
          _
      $region60: #{tpu_custom_call.1} parent=5 // pred_fallthru
        _
    $region6: #{tpu_custom_call.1} parent=1 // loop_footer
      %s26 = sadd.s32 1, %s22
    $region7: #{tpu_custom_call.1} parent=1 // loop_footer_branch
      %21 = sbr.rel target = $region3
    $region8: #{tpu_custom_call.1} parent=1 // loop_exit
      _
    %1582 = vsyncpa [#allocation3], 1
    %s1583 = scalar_lea.sflag [#allocation3], 1
    %1584 = vsyncpa %s1583, 1
    %1585 = vsyncpa [#allocation6], 1
    %1586 = vsyncpa [#allocation4], 1
    %s1587 = scalar_lea.sflag [#allocation4], 1
    %1588 = vsyncpa %s1587, 1
    %1589 = vsyncpa [#allocation10], 1
    %s1590 = scalar_lea.sflag [#allocation10], 1
    %1591 = vsyncpa %s1590, 1

</llo_original>
